<compile_context>
chip_gen: v6e
topology: v6e:2x2x1
jax: 0.10.0
libtpu: 0.0.40
codegen_flags: <defaults>
</compile_context>

<pallas_src>
import functools

import numpy as np
import jax
import jax.numpy as jnp
from jax import lax
from jax.experimental import pallas as pl
from jax.experimental.pallas import tpu as pltpu


# ----------------------------------------------------------------------------
# Kernel: one batch tile (TB elements) per grid step.
# ----------------------------------------------------------------------------
def _spectral_attn_kernel(x_ref, fwd_ref, invri_ref, w1a_ref, w2a_ref,
                          sel_ref, fb_ref, gb_ref, o_ref, *, nh, kp):
    f32 = jnp.float32
    bf16 = jnp.bfloat16
    tb, n, d = x_ref.shape

    x3 = x_ref[...]                                         # (TB, N, D) f32

    # ---- (TB, N, D) -> lane-dense (N, TB*D): in-VMEM lane concatenate ------
    x_nd = jnp.concatenate([x3[b] for b in range(tb)], axis=1)     # (N, TBD)
    xb = x_nd.astype(bf16)

    # ---- rfft along sequence (ortho): single stacked [cos; -sin] matmul ----
    fr_fi = jnp.dot(fwd_ref[...], xb, preferred_element_type=f32)  # (2Kp,TBD)
    fr = fr_fi[:kp]                                                # (Kp, TBD)
    fi = fr_fi[kp:]

    # ---- adaptive filter MLP on the per-batch mean context -----------------
    # Column orientation: features on sublanes, batch on lanes.  Biases are
    # folded into w1a / w2a via a ones row appended to the activations.
    ctx_t = jnp.transpose(jnp.mean(x3, axis=1))                    # (D, TB)
    ones_row = jnp.ones((1, tb), f32)
    ctx_aug = jnp.concatenate([ctx_t, ones_row], axis=0).astype(bf16)
    # TODO(synk): PyTorch nn.GELU() is the exact erf form; the tanh (EUP)
    # approximation used here differs by <~1e-3 and stays inside tolerance.
    h1 = jax.nn.gelu(
        jnp.dot(w1a_ref[...], ctx_aug, preferred_element_type=f32),
        approximate=True)                                          # (D, TB)
    h1_aug = jnp.concatenate([h1, ones_row], axis=0).astype(bf16)  # (D+1, TB)

    # Fused per-head modulation: one stacked matmul for all heads, one tanh,
    # then one 0/1 scatter matmul into the (Kp, TB*D) spectrum layout.
    raw = jnp.dot(w2a_ref[...], h1_aug, preferred_element_type=f32)  # (H*Kp,TB)
    mod = jnp.tanh(raw)
    mod_r = jnp.concatenate([mod[h * kp:(h + 1) * kp] for h in range(nh)],
                            axis=1).astype(bf16)                   # (Kp, H*TB)
    fb = fb_ref[...]                                               # (2Kp, TBD)
    filt = fb[:kp] + jnp.dot(mod_r, sel_ref[...],
                             preferred_element_type=f32)           # (Kp, TBD)

    # ---- apply (real) adaptive filter + modReLU on the complex spectrum ----
    fr = fr * filt
    fi = fi * filt
    zabs = jnp.sqrt(fr * fr + fi * fi)
    act = jnp.maximum(zabs + fb[kp:], 0.0)
    scale = act * pl.reciprocal(jnp.maximum(zabs, 1e-3), approx=True)
    sr = (fr * scale).astype(bf16)
    si = (fi * scale).astype(bf16)

    # ---- irfft (ortho, n = seq_len): two matmuls, no sublane concat --------
    inv = invri_ref[...]                                           # (2, N, Kp)
    xf = (jnp.dot(inv[0], sr, preferred_element_type=f32) +
          jnp.dot(inv[1], si, preferred_element_type=f32))         # (N, TBD)

    # ---- residual (dropout == identity in eval) + LayerNorm (f32 stats) ----
    gb = gb_ref[...]
    gamma = gb[0:1, :]                                             # (1, D)
    beta = gb[1:2, :]
    for b in range(tb):
        y = x3[b] + xf[:, b * d:(b + 1) * d]                       # (N, D)
        mu = jnp.mean(y, axis=-1, keepdims=True)
        dev = y - mu
        var = jnp.mean(dev * dev, axis=-1, keepdims=True)
        o_ref[b] = dev * lax.rsqrt(var + 1e-5) * gamma + beta


# ----------------------------------------------------------------------------
# Batch-tile heuristic: biggest tile with <= 512 lanes; prefer an even grid
# length (v7x megacore) when that keeps >= 256 lanes per tile.
# ----------------------------------------------------------------------------
def _pick_batch_tile(B, D):
    best = 1
    for t in range(1, B + 1):
        if B % t == 0 and t * D <= 512:
            best = t
    if (B // best) % 2 == 1:
        for t in range(best, 0, -1):
            if B % t == 0 and (B // t) % 2 == 0 and t * D >= 256:
                return t
    return best


# ----------------------------------------------------------------------------
# Wrapper: builds the stacked DFT / weight / scatter constants, calls Pallas.
# ----------------------------------------------------------------------------
def multi_head_spectral_attention(x, params, num_heads, *, batch_tile=None):
    W1, b1, W2, b2, base_filter, modrelu_bias, gamma, beta = params
    B, N, D = x.shape
    H = num_heads
    assert D % H == 0, "embed_dim must be divisible by num_heads"
    hd = D // H
    K = N // 2 + 1
    Kp = ((K + 7) // 8) * 8                  # freq bins padded to sublanes
    TB = batch_tile if batch_tile is not None else _pick_batch_tile(B, D)
    assert B % TB == 0, "batch_tile must divide the batch size"
    TBD = TB * D
    f32, bf16 = jnp.float32, jnp.bfloat16

    # ---- ortho real-DFT matrices, [cos; -sin] stacked, freqs padded to Kp --
    n_idx = np.arange(N)
    k_idx = np.arange(K)
    ang = 2.0 * np.pi * np.outer(k_idx, n_idx) / N          # (K, N)
    s = 1.0 / np.sqrt(N)
    cos_m = np.cos(ang) * s
    nsin_m = -np.sin(ang) * s
    fwd = np.zeros((2 * Kp, N), np.float32)
    fwd[:K] = cos_m
    fwd[Kp:Kp + K] = nsin_m
    ck = np.full((K, 1), 2.0, np.float32)                   # Hermitian weights
    ck[0] = 1.0
    if N % 2 == 0:
        ck[K - 1] = 1.0
    invri = np.zeros((2, N, Kp), np.float32)                # irfft, c_k folded
    invri[0, :, :K] = (cos_m * ck).T
    invri[1, :, :K] = (nsin_m * ck).T

    # ---- adaptive-MLP weights, biases folded in as an extra column ---------
    W1n = np.asarray(W1, np.float32)
    b1n = np.asarray(b1, np.float32).reshape(D)
    W2n = np.asarray(W2, np.float32)
    b2n = np.asarray(b2, np.float32).reshape(H * K)
    w1a = np.concatenate([W1n, b1n[:, None]], axis=1)       # (D, D+1)
    w2a = np.zeros((H * Kp, D + 1), np.float32)             # rows = h*Kp + k
    for h in range(H):
        w2a[h * Kp:h * Kp + K, :D] = W2n[h * K:(h + 1) * K]
        w2a[h * Kp:h * Kp + K, D] = b2n[h * K:(h + 1) * K]

    # ---- scatter matrix + expanded base-filter / modReLU-bias constants ----
    sel = np.zeros((H * TB, TBD), np.float32)   # [h*TB+b, b*D + h*hd + j] = 1
    fb = np.zeros((2 * Kp, TBD), np.float32)    # rows [0,Kp)=base, [Kp,2Kp)=bias
    base_n = np.asarray(base_filter, np.float32).reshape(H, K)
    bias_n = np.asarray(modrelu_bias, np.float32).reshape(H, K)
    for b in range(TB):
        for h in range(H):
            c0 = b * D + h * hd
            sel[h * TB + b, c0:c0 + hd] = 1.0
            fb[:K, c0:c0 + hd] = base_n[h][:, None]
            fb[Kp:Kp + K, c0:c0 + hd] = bias_n[h][:, None]
    gb = np.stack([np.asarray(gamma, np.float32).reshape(D),
                   np.asarray(beta, np.float32).reshape(D)])         # (2, D)

    const_args = (
        jnp.asarray(fwd, bf16),
        jnp.asarray(invri, bf16),
        jnp.asarray(w1a, bf16),
        jnp.asarray(w2a, bf16),
        jnp.asarray(sel, bf16),
        jnp.asarray(fb, f32),
        jnp.asarray(gb, f32),
    )

    def const_spec(arr):
        nd = arr.ndim
        # Full-array block with a constant index -> fetched once, reused.
        return pl.BlockSpec(arr.shape, lambda i, _nd=nd: (0,) * _nd)

    out = pl.pallas_call(
        functools.partial(_spectral_attn_kernel, nh=H, kp=Kp),
        out_shape=jax.ShapeDtypeStruct((B, N, D), f32),
        grid=(B // TB,),
        in_specs=[pl.BlockSpec((TB, N, D), lambda i: (i, 0, 0))]
        + [const_spec(a) for a in const_args],
        out_specs=pl.BlockSpec((TB, N, D), lambda i: (i, 0, 0)),
        compiler_params=pltpu.CompilerParams(
            dimension_semantics=("parallel",)),
    )(x.astype(f32), *const_args)
    return out


# ----------------------------------------------------------------------------
# Pure-JAX reference (jnp.fft, exact GELU) for the correctness check.
# ----------------------------------------------------------------------------
def reference(x, params, num_heads):
    W1, b1, W2, b2, base_filter, modrelu_bias, gamma, beta = params
    B, N, D = x.shape
    H = num_heads
    hd = D // H

    xh = x.reshape(B, N, H, hd).transpose(0, 2, 1, 3)          # (B,H,N,hd)
    F = jnp.fft.rfft(xh, axis=2, norm="ortho")                 # (B,H,K,hd)
    ctx = x.mean(axis=1)                                       # (B,D)
    h1 = jax.nn.gelu(ctx @ W1.T + b1, approximate=False)
    mod = jnp.tanh(h1 @ W2.T + b2).reshape(B, H, -1, 1)
    filt = base_filter[None, :, :, None] + mod
    F = F * filt
    zabs = jnp.abs(F)
    scale = jnp.maximum(zabs + modrelu_bias[None, :, :, None], 0.0) / \
        jnp.maximum(zabs, 1e-3)
    F = F * scale
    xf = jnp.fft.irfft(F, n=N, axis=2, norm="ortho")           # (B,H,N,hd)
    xf = xf.transpose(0, 2, 1, 3).reshape(B, N, D)
    y = x + xf
    mu = y.mean(-1, keepdims=True)
    var = ((y - mu) ** 2).mean(-1, keepdims=True)
    return (y - mu) / jnp.sqrt(var + 1e-5) * gamma + beta


if __name__ == "__main__":
    # Small shapes consistent with the module: seq_len N=16, embed_dim D=32,
    # 4 heads; batch 16 so the default batch tile (TB=8 -> 256 lanes) gives an
    # even-length grid (both v7x TensorCores get a step).
    B, N, D, H = 16, 16, 32, 4
    K = N // 2 + 1

    key = jax.random.PRNGKey(0)
    k1, k2, k3, k4, kx = jax.random.split(key, 5)

    W1 = jax.random.normal(k1, (D, D), jnp.float32) * 0.05        # Linear(D, D).weight
    b1 = jax.random.normal(k2, (1, D), jnp.float32) * 0.05        # Linear(D, D).bias
    W2 = jax.random.normal(k3, (H * K, D), jnp.float32) * 0.05    # Linear(D, H*K).weight
    b2 = jax.random.normal(k4, (1, H * K), jnp.float32) * 0.05    # Linear(D, H*K).bias
    base_filter = jnp.ones((H, K), jnp.float32)                   # ones(H, K, 1)
    modrelu_bias = jnp.full((H, K), -0.1, jnp.float32)            # full(-0.1)
    gamma = jnp.ones((1, D), jnp.float32)                         # LayerNorm.weight
    beta = jnp.zeros((1, D), jnp.float32)                         # LayerNorm.bias
    params = (W1, b1, W2, b2, base_filter, modrelu_bias, gamma, beta)

    x = jax.random.normal(kx, (B, N, D), jnp.float32)

    out = multi_head_spectral_attention(x, params, num_heads=H)
    out = jax.block_until_ready(out)

    ref = jax.block_until_ready(reference(x, params, num_heads=H))
    # bf16 matmul operands (f32 accumulation) + tanh-GELU + approx reciprocal
    # -> loosened tolerance vs. the f32 fft reference.
    np.testing.assert_allclose(np.asarray(out), np.asarray(ref),
                               atol=5e-2, rtol=5e-2)

    print("KERNEL_OK")
</pallas_src>

<mosaic_0001>
module attributes {stable_mosaic.version = 11 : i64} {
  func.func @_spectral_attn_kernel(%arg0: i32, %arg1: memref<8x16x32xf32, #tpu.memory_space<vmem>>, %arg2: memref<32x16xbf16, #tpu.memory_space<vmem>>, %arg3: memref<2x16x16xbf16, #tpu.memory_space<vmem>>, %arg4: memref<32x33xbf16, #tpu.memory_space<vmem>>, %arg5: memref<64x33xbf16, #tpu.memory_space<vmem>>, %arg6: memref<32x256xbf16, #tpu.memory_space<vmem>>, %arg7: memref<32x256xf32, #tpu.memory_space<vmem>>, %arg8: memref<2x32xf32, #tpu.memory_space<vmem>>, %arg9: memref<8x16x32xf32, #tpu.memory_space<vmem>>) attributes {dimension_semantics = [#tpu.dimension_semantics<parallel>], iteration_bounds = array<i64: 2>, scalar_prefetch = 0 : i64, scratch_operands = 0 : i64, tpu.core_type = #tpu.core_type<tc>, window_params = [{transform_indices = @transform_0, window_bounds = array<i64: 8, 16, 32>}, {pipeline_mode = #tpu.pipeline_mode<synchronous>, transform_indices = @transform_1, window_bounds = array<i64: 32, 16>}, {pipeline_mode = #tpu.pipeline_mode<synchronous>, transform_indices = @transform_2, window_bounds = array<i64: 2, 16, 16>}, {pipeline_mode = #tpu.pipeline_mode<synchronous>, transform_indices = @transform_3, window_bounds = array<i64: 32, 33>}, {pipeline_mode = #tpu.pipeline_mode<synchronous>, transform_indices = @transform_4, window_bounds = array<i64: 64, 33>}, {pipeline_mode = #tpu.pipeline_mode<synchronous>, transform_indices = @transform_5, window_bounds = array<i64: 32, 256>}, {pipeline_mode = #tpu.pipeline_mode<synchronous>, transform_indices = @transform_6, window_bounds = array<i64: 32, 256>}, {pipeline_mode = #tpu.pipeline_mode<synchronous>, transform_indices = @transform_7, window_bounds = array<i64: 2, 32>}, {transform_indices = @transform_8, window_bounds = array<i64: 8, 16, 32>}]} {
    %c0 = arith.constant 0 : index
    %c0_0 = arith.constant 0 : index
    %c0_1 = arith.constant 0 : index
    %0 = vector.load %arg1[%c0, %c0_0, %c0_1] : memref<8x16x32xf32, #tpu.memory_space<vmem>>, vector<8x16x32xf32>
    %1 = vector.extract_strided_slice %0 {offsets = [0, 0, 0], sizes = [1, 16, 32], strides = [1, 1, 1]} : vector<8x16x32xf32> to vector<1x16x32xf32>
    %2 = vector.shape_cast %1 : vector<1x16x32xf32> to vector<16x32xf32>
    %3 = vector.extract_strided_slice %0 {offsets = [1, 0, 0], sizes = [1, 16, 32], strides = [1, 1, 1]} : vector<8x16x32xf32> to vector<1x16x32xf32>
    %4 = vector.shape_cast %3 : vector<1x16x32xf32> to vector<16x32xf32>
    %5 = vector.extract_strided_slice %0 {offsets = [2, 0, 0], sizes = [1, 16, 32], strides = [1, 1, 1]} : vector<8x16x32xf32> to vector<1x16x32xf32>
    %6 = vector.shape_cast %5 : vector<1x16x32xf32> to vector<16x32xf32>
    %7 = vector.extract_strided_slice %0 {offsets = [3, 0, 0], sizes = [1, 16, 32], strides = [1, 1, 1]} : vector<8x16x32xf32> to vector<1x16x32xf32>
    %8 = vector.shape_cast %7 : vector<1x16x32xf32> to vector<16x32xf32>
    %9 = vector.extract_strided_slice %0 {offsets = [4, 0, 0], sizes = [1, 16, 32], strides = [1, 1, 1]} : vector<8x16x32xf32> to vector<1x16x32xf32>
    %10 = vector.shape_cast %9 : vector<1x16x32xf32> to vector<16x32xf32>
    %11 = vector.extract_strided_slice %0 {offsets = [5, 0, 0], sizes = [1, 16, 32], strides = [1, 1, 1]} : vector<8x16x32xf32> to vector<1x16x32xf32>
    %12 = vector.shape_cast %11 : vector<1x16x32xf32> to vector<16x32xf32>
    %13 = vector.extract_strided_slice %0 {offsets = [6, 0, 0], sizes = [1, 16, 32], strides = [1, 1, 1]} : vector<8x16x32xf32> to vector<1x16x32xf32>
    %14 = vector.shape_cast %13 : vector<1x16x32xf32> to vector<16x32xf32>
    %15 = vector.extract_strided_slice %0 {offsets = [7, 0, 0], sizes = [1, 16, 32], strides = [1, 1, 1]} : vector<8x16x32xf32> to vector<1x16x32xf32>
    %16 = vector.shape_cast %15 : vector<1x16x32xf32> to vector<16x32xf32>
    %17 = tpu.concatenate %2, %4, %6, %8, %10, %12, %14, %16 in 1 : vector<16x32xf32>, vector<16x32xf32>, vector<16x32xf32>, vector<16x32xf32>, vector<16x32xf32>, vector<16x32xf32>, vector<16x32xf32>, vector<16x32xf32> -> vector<16x256xf32>
    %18 = arith.truncf %17 : vector<16x256xf32> to vector<16x256xbf16>
    %c0_2 = arith.constant 0 : index
    %c0_3 = arith.constant 0 : index
    %19 = vector.load %arg2[%c0_2, %c0_3] : memref<32x16xbf16, #tpu.memory_space<vmem>>, vector<32x16xbf16>
    %cst = arith.constant dense<0.000000e+00> : vector<32x256xf32>
    %20 = tpu.matmul %19, %18, %cst {dimension_numbers = #tpu.dot_dimension_numbers<[1], [0], [0], [1], [0, 0, 1, 1], [], []>} : vector<32x16xbf16>, vector<16x256xbf16>, vector<32x256xf32> -> vector<32x256xf32>
    %21 = vector.extract_strided_slice %20 {offsets = [0, 0], sizes = [16, 256], strides = [1, 1]} : vector<32x256xf32> to vector<16x256xf32>
    %22 = vector.extract_strided_slice %20 {offsets = [16, 0], sizes = [16, 256], strides = [1, 1]} : vector<32x256xf32> to vector<16x256xf32>
    %cst_4 = arith.constant dense<0.000000e+00> : vector<8x32xf32>
    %23 = vector.multi_reduction <add>, %0, %cst_4 [1] : vector<8x16x32xf32> to vector<8x32xf32>
    %cst_5 = arith.constant 1.600000e+01 : f32
    %24 = vector.broadcast %cst_5 : f32 to vector<8x32xf32>
    %25 = arith.divf %23, %24 : vector<8x32xf32>
    %26 = tpu.transpose %25, [1, 0] : vector<8x32xf32> -> vector<32x8xf32>
    %cst_6 = arith.constant 1.000000e+00 : f32
    %27 = vector.broadcast %cst_6 : f32 to vector<1x8xf32>
    %28 = tpu.concatenate %26, %27 in 0 : vector<32x8xf32>, vector<1x8xf32> -> vector<33x8xf32>
    %29 = arith.truncf %28 : vector<33x8xf32> to vector<33x8xbf16>
    %c0_7 = arith.constant 0 : index
    %c0_8 = arith.constant 0 : index
    %30 = vector.load %arg4[%c0_7, %c0_8] : memref<32x33xbf16, #tpu.memory_space<vmem>>, vector<32x33xbf16>
    %cst_9 = arith.constant dense<0.000000e+00> : vector<32x8xf32>
    %31 = tpu.matmul %30, %29, %cst_9 {dimension_numbers = #tpu.dot_dimension_numbers<[1], [0], [0], [1], [0, 0, 1, 1], [], []>} : vector<32x33xbf16>, vector<33x8xbf16>, vector<32x8xf32> -> vector<32x8xf32>
    %32 = arith.mulf %31, %31 : vector<32x8xf32>
    %33 = arith.mulf %31, %32 : vector<32x8xf32>
    %cst_10 = arith.constant 4.471500e-02 : f32
    %34 = vector.broadcast %cst_10 : f32 to vector<32x8xf32>
    %35 = arith.mulf %34, %33 : vector<32x8xf32>
    %36 = arith.addf %31, %35 : vector<32x8xf32>
    %cst_11 = arith.constant 0.797884583 : f32
    %37 = vector.broadcast %cst_11 : f32 to vector<32x8xf32>
    %38 = arith.mulf %37, %36 : vector<32x8xf32>
    %39 = math.tanh %38 : vector<32x8xf32>
    %cst_12 = arith.constant 1.000000e+00 : f32
    %40 = vector.broadcast %cst_12 : f32 to vector<32x8xf32>
    %41 = arith.addf %40, %39 : vector<32x8xf32>
    %cst_13 = arith.constant 5.000000e-01 : f32
    %42 = vector.broadcast %cst_13 : f32 to vector<32x8xf32>
    %43 = arith.mulf %42, %41 : vector<32x8xf32>
    %44 = arith.mulf %31, %43 : vector<32x8xf32>
    %45 = tpu.concatenate %44, %27 in 0 : vector<32x8xf32>, vector<1x8xf32> -> vector<33x8xf32>
    %46 = arith.truncf %45 : vector<33x8xf32> to vector<33x8xbf16>
    %c0_14 = arith.constant 0 : index
    %c0_15 = arith.constant 0 : index
    %47 = vector.load %arg5[%c0_14, %c0_15] : memref<64x33xbf16, #tpu.memory_space<vmem>>, vector<64x33xbf16>
    %cst_16 = arith.constant dense<0.000000e+00> : vector<64x8xf32>
    %48 = tpu.matmul %47, %46, %cst_16 {dimension_numbers = #tpu.dot_dimension_numbers<[1], [0], [0], [1], [0, 0, 1, 1], [], []>} : vector<64x33xbf16>, vector<33x8xbf16>, vector<64x8xf32> -> vector<64x8xf32>
    %49 = math.tanh %48 : vector<64x8xf32>
    %50 = vector.extract_strided_slice %49 {offsets = [0, 0], sizes = [16, 8], strides = [1, 1]} : vector<64x8xf32> to vector<16x8xf32>
    %51 = vector.extract_strided_slice %49 {offsets = [16, 0], sizes = [16, 8], strides = [1, 1]} : vector<64x8xf32> to vector<16x8xf32>
    %52 = vector.extract_strided_slice %49 {offsets = [32, 0], sizes = [16, 8], strides = [1, 1]} : vector<64x8xf32> to vector<16x8xf32>
    %53 = vector.extract_strided_slice %49 {offsets = [48, 0], sizes = [16, 8], strides = [1, 1]} : vector<64x8xf32> to vector<16x8xf32>
    %54 = tpu.concatenate %50, %51, %52, %53 in 1 : vector<16x8xf32>, vector<16x8xf32>, vector<16x8xf32>, vector<16x8xf32> -> vector<16x32xf32>
    %55 = arith.truncf %54 : vector<16x32xf32> to vector<16x32xbf16>
    %c0_17 = arith.constant 0 : index
    %c0_18 = arith.constant 0 : index
    %56 = vector.load %arg7[%c0_17, %c0_18] : memref<32x256xf32, #tpu.memory_space<vmem>>, vector<32x256xf32>
    %57 = vector.extract_strided_slice %56 {offsets = [0, 0], sizes = [16, 256], strides = [1, 1]} : vector<32x256xf32> to vector<16x256xf32>
    %c0_19 = arith.constant 0 : index
    %c0_20 = arith.constant 0 : index
    %58 = vector.load %arg6[%c0_19, %c0_20] : memref<32x256xbf16, #tpu.memory_space<vmem>>, vector<32x256xbf16>
    %cst_21 = arith.constant dense<0.000000e+00> : vector<16x256xf32>
    %59 = tpu.matmul %55, %58, %cst_21 {dimension_numbers = #tpu.dot_dimension_numbers<[1], [0], [0], [1], [0, 0, 1, 1], [], []>} : vector<16x32xbf16>, vector<32x256xbf16>, vector<16x256xf32> -> vector<16x256xf32>
    %60 = arith.addf %57, %59 : vector<16x256xf32>
    %61 = arith.mulf %21, %60 : vector<16x256xf32>
    %62 = arith.mulf %22, %60 : vector<16x256xf32>
    %63 = arith.mulf %61, %61 : vector<16x256xf32>
    %64 = arith.mulf %62, %62 : vector<16x256xf32>
    %65 = arith.addf %63, %64 : vector<16x256xf32>
    %66 = math.sqrt %65 : vector<16x256xf32>
    %67 = vector.extract_strided_slice %56 {offsets = [16, 0], sizes = [16, 256], strides = [1, 1]} : vector<32x256xf32> to vector<16x256xf32>
    %68 = arith.addf %66, %67 : vector<16x256xf32>
    %cst_22 = arith.constant 0.000000e+00 : f32
    %69 = vector.broadcast %cst_22 : f32 to vector<16x256xf32>
    %70 = arith.maximumf %68, %69 : vector<16x256xf32>
    %cst_23 = arith.constant 1.000000e-03 : f32
    %71 = vector.broadcast %cst_23 : f32 to vector<16x256xf32>
    %72 = arith.maximumf %66, %71 : vector<16x256xf32>
    %73 = tpu.reciprocal %72 {approx = true} : vector<16x256xf32> -> vector<16x256xf32>
    %74 = arith.mulf %70, %73 : vector<16x256xf32>
    %75 = arith.mulf %61, %74 : vector<16x256xf32>
    %76 = arith.truncf %75 : vector<16x256xf32> to vector<16x256xbf16>
    %77 = arith.mulf %62, %74 : vector<16x256xf32>
    %78 = arith.truncf %77 : vector<16x256xf32> to vector<16x256xbf16>
    %c0_24 = arith.constant 0 : index
    %c0_25 = arith.constant 0 : index
    %c0_26 = arith.constant 0 : index
    %79 = vector.load %arg3[%c0_24, %c0_25, %c0_26] : memref<2x16x16xbf16, #tpu.memory_space<vmem>>, vector<2x16x16xbf16>
    %80 = vector.extract_strided_slice %79 {offsets = [0, 0, 0], sizes = [1, 16, 16], strides = [1, 1, 1]} : vector<2x16x16xbf16> to vector<1x16x16xbf16>
    %81 = vector.shape_cast %80 : vector<1x16x16xbf16> to vector<16x16xbf16>
    %cst_27 = arith.constant dense<0.000000e+00> : vector<16x256xf32>
    %82 = tpu.matmul %81, %76, %cst_27 {dimension_numbers = #tpu.dot_dimension_numbers<[1], [0], [0], [1], [0, 0, 1, 1], [], []>} : vector<16x16xbf16>, vector<16x256xbf16>, vector<16x256xf32> -> vector<16x256xf32>
    %83 = vector.extract_strided_slice %79 {offsets = [1, 0, 0], sizes = [1, 16, 16], strides = [1, 1, 1]} : vector<2x16x16xbf16> to vector<1x16x16xbf16>
    %84 = vector.shape_cast %83 : vector<1x16x16xbf16> to vector<16x16xbf16>
    %cst_28 = arith.constant dense<0.000000e+00> : vector<16x256xf32>
    %85 = tpu.matmul %84, %78, %cst_28 {dimension_numbers = #tpu.dot_dimension_numbers<[1], [0], [0], [1], [0, 0, 1, 1], [], []>} : vector<16x16xbf16>, vector<16x256xbf16>, vector<16x256xf32> -> vector<16x256xf32>
    %86 = arith.addf %82, %85 : vector<16x256xf32>
    %c0_29 = arith.constant 0 : index
    %c0_30 = arith.constant 0 : index
    %87 = vector.load %arg8[%c0_29, %c0_30] : memref<2x32xf32, #tpu.memory_space<vmem>>, vector<2x32xf32>
    %88 = vector.extract_strided_slice %87 {offsets = [0, 0], sizes = [1, 32], strides = [1, 1]} : vector<2x32xf32> to vector<1x32xf32>
    %89 = vector.extract_strided_slice %87 {offsets = [1, 0], sizes = [1, 32], strides = [1, 1]} : vector<2x32xf32> to vector<1x32xf32>
    %90 = vector.extract_strided_slice %0 {offsets = [0, 0, 0], sizes = [1, 16, 32], strides = [1, 1, 1]} : vector<8x16x32xf32> to vector<1x16x32xf32>
    %91 = vector.shape_cast %90 : vector<1x16x32xf32> to vector<16x32xf32>
    %92 = vector.extract_strided_slice %86 {offsets = [0, 0], sizes = [16, 32], strides = [1, 1]} : vector<16x256xf32> to vector<16x32xf32>
    %93 = arith.addf %91, %92 : vector<16x32xf32>
    %cst_31 = arith.constant dense<0.000000e+00> : vector<16xf32>
    %94 = vector.multi_reduction <add>, %93, %cst_31 [1] : vector<16x32xf32> to vector<16xf32>
    %95 = vector.shape_cast %94 : vector<16xf32> to vector<16x1xf32>
    %cst_32 = arith.constant 3.200000e+01 : f32
    %96 = vector.broadcast %cst_32 : f32 to vector<16x1xf32>
    %97 = arith.divf %95, %96 : vector<16x1xf32>
    %98 = vector.broadcast %97 : vector<16x1xf32> to vector<16x32xf32>
    %99 = arith.subf %93, %98 : vector<16x32xf32>
    %100 = arith.mulf %99, %99 : vector<16x32xf32>
    %cst_33 = arith.constant dense<0.000000e+00> : vector<16xf32>
    %101 = vector.multi_reduction <add>, %100, %cst_33 [1] : vector<16x32xf32> to vector<16xf32>
    %102 = vector.shape_cast %101 : vector<16xf32> to vector<16x1xf32>
    %cst_34 = arith.constant 3.200000e+01 : f32
    %103 = vector.broadcast %cst_34 : f32 to vector<16x1xf32>
    %104 = arith.divf %102, %103 : vector<16x1xf32>
    %cst_35 = arith.constant 9.99999974E-6 : f32
    %105 = vector.broadcast %cst_35 : f32 to vector<16x1xf32>
    %106 = arith.addf %104, %105 : vector<16x1xf32>
    %107 = math.rsqrt %106 : vector<16x1xf32>
    %108 = vector.broadcast %107 : vector<16x1xf32> to vector<16x32xf32>
    %109 = arith.mulf %99, %108 : vector<16x32xf32>
    %110 = vector.broadcast %88 : vector<1x32xf32> to vector<16x32xf32>
    %111 = arith.mulf %109, %110 : vector<16x32xf32>
    %112 = vector.broadcast %89 : vector<1x32xf32> to vector<16x32xf32>
    %113 = arith.addf %111, %112 : vector<16x32xf32>
    %c0_36 = arith.constant 0 : index
    %c0_37 = arith.constant 0 : index
    %c0_38 = arith.constant 0 : index
    %114 = vector.load %arg9[%c0_36, %c0_37, %c0_38] : memref<8x16x32xf32, #tpu.memory_space<vmem>>, vector<1x16x32xf32>
    %115 = vector.shape_cast %114 : vector<1x16x32xf32> to vector<16x32xf32>
    %116 = vector.shape_cast %113 : vector<16x32xf32> to vector<1x16x32xf32>
    tpu.vector_store %arg9[%c0_36, %c0_37, %c0_38], %116 {strides = array<i32>} : memref<8x16x32xf32, #tpu.memory_space<vmem>>, vector<1x16x32xf32>,
    %117 = vector.extract_strided_slice %0 {offsets = [1, 0, 0], sizes = [1, 16, 32], strides = [1, 1, 1]} : vector<8x16x32xf32> to vector<1x16x32xf32>
    %118 = vector.shape_cast %117 : vector<1x16x32xf32> to vector<16x32xf32>
    %119 = vector.extract_strided_slice %86 {offsets = [0, 32], sizes = [16, 32], strides = [1, 1]} : vector<16x256xf32> to vector<16x32xf32>
    %120 = arith.addf %118, %119 : vector<16x32xf32>
    %cst_39 = arith.constant dense<0.000000e+00> : vector<16xf32>
    %121 = vector.multi_reduction <add>, %120, %cst_39 [1] : vector<16x32xf32> to vector<16xf32>
    %122 = vector.shape_cast %121 : vector<16xf32> to vector<16x1xf32>
    %cst_40 = arith.constant 3.200000e+01 : f32
    %123 = vector.broadcast %cst_40 : f32 to vector<16x1xf32>
    %124 = arith.divf %122, %123 : vector<16x1xf32>
    %125 = vector.broadcast %124 : vector<16x1xf32> to vector<16x32xf32>
    %126 = arith.subf %120, %125 : vector<16x32xf32>
    %127 = arith.mulf %126, %126 : vector<16x32xf32>
    %cst_41 = arith.constant dense<0.000000e+00> : vector<16xf32>
    %128 = vector.multi_reduction <add>, %127, %cst_41 [1] : vector<16x32xf32> to vector<16xf32>
    %129 = vector.shape_cast %128 : vector<16xf32> to vector<16x1xf32>
    %cst_42 = arith.constant 3.200000e+01 : f32
    %130 = vector.broadcast %cst_42 : f32 to vector<16x1xf32>
    %131 = arith.divf %129, %130 : vector<16x1xf32>
    %cst_43 = arith.constant 9.99999974E-6 : f32
    %132 = vector.broadcast %cst_43 : f32 to vector<16x1xf32>
    %133 = arith.addf %131, %132 : vector<16x1xf32>
    %134 = math.rsqrt %133 : vector<16x1xf32>
    %135 = vector.broadcast %134 : vector<16x1xf32> to vector<16x32xf32>
    %136 = arith.mulf %126, %135 : vector<16x32xf32>
    %137 = vector.broadcast %88 : vector<1x32xf32> to vector<16x32xf32>
    %138 = arith.mulf %136, %137 : vector<16x32xf32>
    %139 = vector.broadcast %89 : vector<1x32xf32> to vector<16x32xf32>
    %140 = arith.addf %138, %139 : vector<16x32xf32>
    %c1 = arith.constant 1 : index
    %c0_44 = arith.constant 0 : index
    %c0_45 = arith.constant 0 : index
    %141 = vector.load %arg9[%c1, %c0_44, %c0_45] : memref<8x16x32xf32, #tpu.memory_space<vmem>>, vector<1x16x32xf32>
    %142 = vector.shape_cast %141 : vector<1x16x32xf32> to vector<16x32xf32>
    %143 = vector.shape_cast %140 : vector<16x32xf32> to vector<1x16x32xf32>
    tpu.vector_store %arg9[%c1, %c0_44, %c0_45], %143 {strides = array<i32>} : memref<8x16x32xf32, #tpu.memory_space<vmem>>, vector<1x16x32xf32>,
    %144 = vector.extract_strided_slice %0 {offsets = [2, 0, 0], sizes = [1, 16, 32], strides = [1, 1, 1]} : vector<8x16x32xf32> to vector<1x16x32xf32>
    %145 = vector.shape_cast %144 : vector<1x16x32xf32> to vector<16x32xf32>
    %146 = vector.extract_strided_slice %86 {offsets = [0, 64], sizes = [16, 32], strides = [1, 1]} : vector<16x256xf32> to vector<16x32xf32>
    %147 = arith.addf %145, %146 : vector<16x32xf32>
    %cst_46 = arith.constant dense<0.000000e+00> : vector<16xf32>
    %148 = vector.multi_reduction <add>, %147, %cst_46 [1] : vector<16x32xf32> to vector<16xf32>
    %149 = vector.shape_cast %148 : vector<16xf32> to vector<16x1xf32>
    %cst_47 = arith.constant 3.200000e+01 : f32
    %150 = vector.broadcast %cst_47 : f32 to vector<16x1xf32>
    %151 = arith.divf %149, %150 : vector<16x1xf32>
    %152 = vector.broadcast %151 : vector<16x1xf32> to vector<16x32xf32>
    %153 = arith.subf %147, %152 : vector<16x32xf32>
    %154 = arith.mulf %153, %153 : vector<16x32xf32>
    %cst_48 = arith.constant dense<0.000000e+00> : vector<16xf32>
    %155 = vector.multi_reduction <add>, %154, %cst_48 [1] : vector<16x32xf32> to vector<16xf32>
    %156 = vector.shape_cast %155 : vector<16xf32> to vector<16x1xf32>
    %cst_49 = arith.constant 3.200000e+01 : f32
    %157 = vector.broadcast %cst_49 : f32 to vector<16x1xf32>
    %158 = arith.divf %156, %157 : vector<16x1xf32>
    %cst_50 = arith.constant 9.99999974E-6 : f32
    %159 = vector.broadcast %cst_50 : f32 to vector<16x1xf32>
    %160 = arith.addf %158, %159 : vector<16x1xf32>
    %161 = math.rsqrt %160 : vector<16x1xf32>
    %162 = vector.broadcast %161 : vector<16x1xf32> to vector<16x32xf32>
    %163 = arith.mulf %153, %162 : vector<16x32xf32>
    %164 = vector.broadcast %88 : vector<1x32xf32> to vector<16x32xf32>
    %165 = arith.mulf %163, %164 : vector<16x32xf32>
    %166 = vector.broadcast %89 : vector<1x32xf32> to vector<16x32xf32>
    %167 = arith.addf %165, %166 : vector<16x32xf32>
    %c2 = arith.constant 2 : index
    %c0_51 = arith.constant 0 : index
    %c0_52 = arith.constant 0 : index
    %168 = vector.load %arg9[%c2, %c0_51, %c0_52] : memref<8x16x32xf32, #tpu.memory_space<vmem>>, vector<1x16x32xf32>
    %169 = vector.shape_cast %168 : vector<1x16x32xf32> to vector<16x32xf32>
    %170 = vector.shape_cast %167 : vector<16x32xf32> to vector<1x16x32xf32>
    tpu.vector_store %arg9[%c2, %c0_51, %c0_52], %170 {strides = array<i32>} : memref<8x16x32xf32, #tpu.memory_space<vmem>>, vector<1x16x32xf32>,
    %171 = vector.extract_strided_slice %0 {offsets = [3, 0, 0], sizes = [1, 16, 32], strides = [1, 1, 1]} : vector<8x16x32xf32> to vector<1x16x32xf32>
    %172 = vector.shape_cast %171 : vector<1x16x32xf32> to vector<16x32xf32>
    %173 = vector.extract_strided_slice %86 {offsets = [0, 96], sizes = [16, 32], strides = [1, 1]} : vector<16x256xf32> to vector<16x32xf32>
    %174 = arith.addf %172, %173 : vector<16x32xf32>
    %cst_53 = arith.constant dense<0.000000e+00> : vector<16xf32>
    %175 = vector.multi_reduction <add>, %174, %cst_53 [1] : vector<16x32xf32> to vector<16xf32>
    %176 = vector.shape_cast %175 : vector<16xf32> to vector<16x1xf32>
    %cst_54 = arith.constant 3.200000e+01 : f32
    %177 = vector.broadcast %cst_54 : f32 to vector<16x1xf32>
    %178 = arith.divf %176, %177 : vector<16x1xf32>
    %179 = vector.broadcast %178 : vector<16x1xf32> to vector<16x32xf32>
    %180 = arith.subf %174, %179 : vector<16x32xf32>
    %181 = arith.mulf %180, %180 : vector<16x32xf32>
    %cst_55 = arith.constant dense<0.000000e+00> : vector<16xf32>
    %182 = vector.multi_reduction <add>, %181, %cst_55 [1] : vector<16x32xf32> to vector<16xf32>
    %183 = vector.shape_cast %182 : vector<16xf32> to vector<16x1xf32>
    %cst_56 = arith.constant 3.200000e+01 : f32
    %184 = vector.broadcast %cst_56 : f32 to vector<16x1xf32>
    %185 = arith.divf %183, %184 : vector<16x1xf32>
    %cst_57 = arith.constant 9.99999974E-6 : f32
    %186 = vector.broadcast %cst_57 : f32 to vector<16x1xf32>
    %187 = arith.addf %185, %186 : vector<16x1xf32>
    %188 = math.rsqrt %187 : vector<16x1xf32>
    %189 = vector.broadcast %188 : vector<16x1xf32> to vector<16x32xf32>
    %190 = arith.mulf %180, %189 : vector<16x32xf32>
    %191 = vector.broadcast %88 : vector<1x32xf32> to vector<16x32xf32>
    %192 = arith.mulf %190, %191 : vector<16x32xf32>
    %193 = vector.broadcast %89 : vector<1x32xf32> to vector<16x32xf32>
    %194 = arith.addf %192, %193 : vector<16x32xf32>
    %c3 = arith.constant 3 : index
    %c0_58 = arith.constant 0 : index
    %c0_59 = arith.constant 0 : index
    %195 = vector.load %arg9[%c3, %c0_58, %c0_59] : memref<8x16x32xf32, #tpu.memory_space<vmem>>, vector<1x16x32xf32>
    %196 = vector.shape_cast %195 : vector<1x16x32xf32> to vector<16x32xf32>
    %197 = vector.shape_cast %194 : vector<16x32xf32> to vector<1x16x32xf32>
    tpu.vector_store %arg9[%c3, %c0_58, %c0_59], %197 {strides = array<i32>} : memref<8x16x32xf32, #tpu.memory_space<vmem>>, vector<1x16x32xf32>,
    %198 = vector.extract_strided_slice %0 {offsets = [4, 0, 0], sizes = [1, 16, 32], strides = [1, 1, 1]} : vector<8x16x32xf32> to vector<1x16x32xf32>
    %199 = vector.shape_cast %198 : vector<1x16x32xf32> to vector<16x32xf32>
    %200 = vector.extract_strided_slice %86 {offsets = [0, 128], sizes = [16, 32], strides = [1, 1]} : vector<16x256xf32> to vector<16x32xf32>
    %201 = arith.addf %199, %200 : vector<16x32xf32>
    %cst_60 = arith.constant dense<0.000000e+00> : vector<16xf32>
    %202 = vector.multi_reduction <add>, %201, %cst_60 [1] : vector<16x32xf32> to vector<16xf32>
    %203 = vector.shape_cast %202 : vector<16xf32> to vector<16x1xf32>
    %cst_61 = arith.constant 3.200000e+01 : f32
    %204 = vector.broadcast %cst_61 : f32 to vector<16x1xf32>
    %205 = arith.divf %203, %204 : vector<16x1xf32>
    %206 = vector.broadcast %205 : vector<16x1xf32> to vector<16x32xf32>
    %207 = arith.subf %201, %206 : vector<16x32xf32>
    %208 = arith.mulf %207, %207 : vector<16x32xf32>
    %cst_62 = arith.constant dense<0.000000e+00> : vector<16xf32>
    %209 = vector.multi_reduction <add>, %208, %cst_62 [1] : vector<16x32xf32> to vector<16xf32>
    %210 = vector.shape_cast %209 : vector<16xf32> to vector<16x1xf32>
    %cst_63 = arith.constant 3.200000e+01 : f32
    %211 = vector.broadcast %cst_63 : f32 to vector<16x1xf32>
    %212 = arith.divf %210, %211 : vector<16x1xf32>
    %cst_64 = arith.constant 9.99999974E-6 : f32
    %213 = vector.broadcast %cst_64 : f32 to vector<16x1xf32>
    %214 = arith.addf %212, %213 : vector<16x1xf32>
    %215 = math.rsqrt %214 : vector<16x1xf32>
    %216 = vector.broadcast %215 : vector<16x1xf32> to vector<16x32xf32>
    %217 = arith.mulf %207, %216 : vector<16x32xf32>
    %218 = vector.broadcast %88 : vector<1x32xf32> to vector<16x32xf32>
    %219 = arith.mulf %217, %218 : vector<16x32xf32>
    %220 = vector.broadcast %89 : vector<1x32xf32> to vector<16x32xf32>
    %221 = arith.addf %219, %220 : vector<16x32xf32>
    %c4 = arith.constant 4 : index
    %c0_65 = arith.constant 0 : index
    %c0_66 = arith.constant 0 : index
    %222 = vector.load %arg9[%c4, %c0_65, %c0_66] : memref<8x16x32xf32, #tpu.memory_space<vmem>>, vector<1x16x32xf32>
    %223 = vector.shape_cast %222 : vector<1x16x32xf32> to vector<16x32xf32>
    %224 = vector.shape_cast %221 : vector<16x32xf32> to vector<1x16x32xf32>
    tpu.vector_store %arg9[%c4, %c0_65, %c0_66], %224 {strides = array<i32>} : memref<8x16x32xf32, #tpu.memory_space<vmem>>, vector<1x16x32xf32>,
    %225 = vector.extract_strided_slice %0 {offsets = [5, 0, 0], sizes = [1, 16, 32], strides = [1, 1, 1]} : vector<8x16x32xf32> to vector<1x16x32xf32>
    %226 = vector.shape_cast %225 : vector<1x16x32xf32> to vector<16x32xf32>
    %227 = vector.extract_strided_slice %86 {offsets = [0, 160], sizes = [16, 32], strides = [1, 1]} : vector<16x256xf32> to vector<16x32xf32>
    %228 = arith.addf %226, %227 : vector<16x32xf32>
    %cst_67 = arith.constant dense<0.000000e+00> : vector<16xf32>
    %229 = vector.multi_reduction <add>, %228, %cst_67 [1] : vector<16x32xf32> to vector<16xf32>
    %230 = vector.shape_cast %229 : vector<16xf32> to vector<16x1xf32>
    %cst_68 = arith.constant 3.200000e+01 : f32
    %231 = vector.broadcast %cst_68 : f32 to vector<16x1xf32>
    %232 = arith.divf %230, %231 : vector<16x1xf32>
    %233 = vector.broadcast %232 : vector<16x1xf32> to vector<16x32xf32>
    %234 = arith.subf %228, %233 : vector<16x32xf32>
    %235 = arith.mulf %234, %234 : vector<16x32xf32>
    %cst_69 = arith.constant dense<0.000000e+00> : vector<16xf32>
    %236 = vector.multi_reduction <add>, %235, %cst_69 [1] : vector<16x32xf32> to vector<16xf32>
    %237 = vector.shape_cast %236 : vector<16xf32> to vector<16x1xf32>
    %cst_70 = arith.constant 3.200000e+01 : f32
    %238 = vector.broadcast %cst_70 : f32 to vector<16x1xf32>
    %239 = arith.divf %237, %238 : vector<16x1xf32>
    %cst_71 = arith.constant 9.99999974E-6 : f32
    %240 = vector.broadcast %cst_71 : f32 to vector<16x1xf32>
    %241 = arith.addf %239, %240 : vector<16x1xf32>
    %242 = math.rsqrt %241 : vector<16x1xf32>
    %243 = vector.broadcast %242 : vector<16x1xf32> to vector<16x32xf32>
    %244 = arith.mulf %234, %243 : vector<16x32xf32>
    %245 = vector.broadcast %88 : vector<1x32xf32> to vector<16x32xf32>
    %246 = arith.mulf %244, %245 : vector<16x32xf32>
    %247 = vector.broadcast %89 : vector<1x32xf32> to vector<16x32xf32>
    %248 = arith.addf %246, %247 : vector<16x32xf32>
    %c5 = arith.constant 5 : index
    %c0_72 = arith.constant 0 : index
    %c0_73 = arith.constant 0 : index
    %249 = vector.load %arg9[%c5, %c0_72, %c0_73] : memref<8x16x32xf32, #tpu.memory_space<vmem>>, vector<1x16x32xf32>
    %250 = vector.shape_cast %249 : vector<1x16x32xf32> to vector<16x32xf32>
    %251 = vector.shape_cast %248 : vector<16x32xf32> to vector<1x16x32xf32>
    tpu.vector_store %arg9[%c5, %c0_72, %c0_73], %251 {strides = array<i32>} : memref<8x16x32xf32, #tpu.memory_space<vmem>>, vector<1x16x32xf32>,
    %252 = vector.extract_strided_slice %0 {offsets = [6, 0, 0], sizes = [1, 16, 32], strides = [1, 1, 1]} : vector<8x16x32xf32> to vector<1x16x32xf32>
    %253 = vector.shape_cast %252 : vector<1x16x32xf32> to vector<16x32xf32>
    %254 = vector.extract_strided_slice %86 {offsets = [0, 192], sizes = [16, 32], strides = [1, 1]} : vector<16x256xf32> to vector<16x32xf32>
    %255 = arith.addf %253, %254 : vector<16x32xf32>
    %cst_74 = arith.constant dense<0.000000e+00> : vector<16xf32>
    %256 = vector.multi_reduction <add>, %255, %cst_74 [1] : vector<16x32xf32> to vector<16xf32>
    %257 = vector.shape_cast %256 : vector<16xf32> to vector<16x1xf32>
    %cst_75 = arith.constant 3.200000e+01 : f32
    %258 = vector.broadcast %cst_75 : f32 to vector<16x1xf32>
    %259 = arith.divf %257, %258 : vector<16x1xf32>
    %260 = vector.broadcast %259 : vector<16x1xf32> to vector<16x32xf32>
    %261 = arith.subf %255, %260 : vector<16x32xf32>
    %262 = arith.mulf %261, %261 : vector<16x32xf32>
    %cst_76 = arith.constant dense<0.000000e+00> : vector<16xf32>
    %263 = vector.multi_reduction <add>, %262, %cst_76 [1] : vector<16x32xf32> to vector<16xf32>
    %264 = vector.shape_cast %263 : vector<16xf32> to vector<16x1xf32>
    %cst_77 = arith.constant 3.200000e+01 : f32
    %265 = vector.broadcast %cst_77 : f32 to vector<16x1xf32>
    %266 = arith.divf %264, %265 : vector<16x1xf32>
    %cst_78 = arith.constant 9.99999974E-6 : f32
    %267 = vector.broadcast %cst_78 : f32 to vector<16x1xf32>
    %268 = arith.addf %266, %267 : vector<16x1xf32>
    %269 = math.rsqrt %268 : vector<16x1xf32>
    %270 = vector.broadcast %269 : vector<16x1xf32> to vector<16x32xf32>
    %271 = arith.mulf %261, %270 : vector<16x32xf32>
    %272 = vector.broadcast %88 : vector<1x32xf32> to vector<16x32xf32>
    %273 = arith.mulf %271, %272 : vector<16x32xf32>
    %274 = vector.broadcast %89 : vector<1x32xf32> to vector<16x32xf32>
    %275 = arith.addf %273, %274 : vector<16x32xf32>
    %c6 = arith.constant 6 : index
    %c0_79 = arith.constant 0 : index
    %c0_80 = arith.constant 0 : index
    %276 = vector.load %arg9[%c6, %c0_79, %c0_80] : memref<8x16x32xf32, #tpu.memory_space<vmem>>, vector<1x16x32xf32>
    %277 = vector.shape_cast %276 : vector<1x16x32xf32> to vector<16x32xf32>
    %278 = vector.shape_cast %275 : vector<16x32xf32> to vector<1x16x32xf32>
    tpu.vector_store %arg9[%c6, %c0_79, %c0_80], %278 {strides = array<i32>} : memref<8x16x32xf32, #tpu.memory_space<vmem>>, vector<1x16x32xf32>,
    %279 = vector.extract_strided_slice %0 {offsets = [7, 0, 0], sizes = [1, 16, 32], strides = [1, 1, 1]} : vector<8x16x32xf32> to vector<1x16x32xf32>
    %280 = vector.shape_cast %279 : vector<1x16x32xf32> to vector<16x32xf32>
    %281 = vector.extract_strided_slice %86 {offsets = [0, 224], sizes = [16, 32], strides = [1, 1]} : vector<16x256xf32> to vector<16x32xf32>
    %282 = arith.addf %280, %281 : vector<16x32xf32>
    %cst_81 = arith.constant dense<0.000000e+00> : vector<16xf32>
    %283 = vector.multi_reduction <add>, %282, %cst_81 [1] : vector<16x32xf32> to vector<16xf32>
    %284 = vector.shape_cast %283 : vector<16xf32> to vector<16x1xf32>
    %cst_82 = arith.constant 3.200000e+01 : f32
    %285 = vector.broadcast %cst_82 : f32 to vector<16x1xf32>
    %286 = arith.divf %284, %285 : vector<16x1xf32>
    %287 = vector.broadcast %286 : vector<16x1xf32> to vector<16x32xf32>
    %288 = arith.subf %282, %287 : vector<16x32xf32>
    %289 = arith.mulf %288, %288 : vector<16x32xf32>
    %cst_83 = arith.constant dense<0.000000e+00> : vector<16xf32>
    %290 = vector.multi_reduction <add>, %289, %cst_83 [1] : vector<16x32xf32> to vector<16xf32>
    %291 = vector.shape_cast %290 : vector<16xf32> to vector<16x1xf32>
    %cst_84 = arith.constant 3.200000e+01 : f32
    %292 = vector.broadcast %cst_84 : f32 to vector<16x1xf32>
    %293 = arith.divf %291, %292 : vector<16x1xf32>
    %cst_85 = arith.constant 9.99999974E-6 : f32
    %294 = vector.broadcast %cst_85 : f32 to vector<16x1xf32>
    %295 = arith.addf %293, %294 : vector<16x1xf32>
    %296 = math.rsqrt %295 : vector<16x1xf32>
    %297 = vector.broadcast %296 : vector<16x1xf32> to vector<16x32xf32>
    %298 = arith.mulf %288, %297 : vector<16x32xf32>
    %299 = vector.broadcast %88 : vector<1x32xf32> to vector<16x32xf32>
    %300 = arith.mulf %298, %299 : vector<16x32xf32>
    %301 = vector.broadcast %89 : vector<1x32xf32> to vector<16x32xf32>
    %302 = arith.addf %300, %301 : vector<16x32xf32>
    %c7 = arith.constant 7 : index
    %c0_86 = arith.constant 0 : index
    %c0_87 = arith.constant 0 : index
    %303 = vector.load %arg9[%c7, %c0_86, %c0_87] : memref<8x16x32xf32, #tpu.memory_space<vmem>>, vector<1x16x32xf32>
    %304 = vector.shape_cast %303 : vector<1x16x32xf32> to vector<16x32xf32>
    %305 = vector.shape_cast %302 : vector<16x32xf32> to vector<1x16x32xf32>
    tpu.vector_store %arg9[%c7, %c0_86, %c0_87], %305 {strides = array<i32>} : memref<8x16x32xf32, #tpu.memory_space<vmem>>, vector<1x16x32xf32>,
    return
  }
  func.func @transform_0(%arg0: i32) -> (i32, i32, i32) {
    %c0_i32 = arith.constant 0 : i32
    %c0_i32_0 = arith.constant 0 : i32
    %c0_i32_1 = arith.constant 0 : i32
    return %arg0, %c0_i32, %c0_i32_0 : i32, i32, i32
  }
  func.func @transform_1(%arg0: i32) -> (i32, i32) {
    %c0_i32 = arith.constant 0 : i32
    %c0_i32_0 = arith.constant 0 : i32
    %c0_i32_1 = arith.constant 0 : i32
    return %c0_i32, %c0_i32_0 : i32, i32
  }
  func.func @transform_2(%arg0: i32) -> (i32, i32, i32) {
    %c0_i32 = arith.constant 0 : i32
    %c0_i32_0 = arith.constant 0 : i32
    %c0_i32_1 = arith.constant 0 : i32
    %c0_i32_2 = arith.constant 0 : i32
    return %c0_i32, %c0_i32_0, %c0_i32_1 : i32, i32, i32
  }
  func.func @transform_3(%arg0: i32) -> (i32, i32) {
    %c0_i32 = arith.constant 0 : i32
    %c0_i32_0 = arith.constant 0 : i32
    %c0_i32_1 = arith.constant 0 : i32
    return %c0_i32, %c0_i32_0 : i32, i32
  }
  func.func @transform_4(%arg0: i32) -> (i32, i32) {
    %c0_i32 = arith.constant 0 : i32
    %c0_i32_0 = arith.constant 0 : i32
    %c0_i32_1 = arith.constant 0 : i32
    return %c0_i32, %c0_i32_0 : i32, i32
  }
  func.func @transform_5(%arg0: i32) -> (i32, i32) {
    %c0_i32 = arith.constant 0 : i32
    %c0_i32_0 = arith.constant 0 : i32
    %c0_i32_1 = arith.constant 0 : i32
    return %c0_i32, %c0_i32_0 : i32, i32
  }
  func.func @transform_6(%arg0: i32) -> (i32, i32) {
    %c0_i32 = arith.constant 0 : i32
    %c0_i32_0 = arith.constant 0 : i32
    %c0_i32_1 = arith.constant 0 : i32
    return %c0_i32, %c0_i32_0 : i32, i32
  }
  func.func @transform_7(%arg0: i32) -> (i32, i32) {
    %c0_i32 = arith.constant 0 : i32
    %c0_i32_0 = arith.constant 0 : i32
    %c0_i32_1 = arith.constant 0 : i32
    return %c0_i32, %c0_i32_0 : i32, i32
  }
  func.func @transform_8(%arg0: i32) -> (i32, i32, i32) {
    %c0_i32 = arith.constant 0 : i32
    %c0_i32_0 = arith.constant 0 : i32
    %c0_i32_1 = arith.constant 0 : i32
    return %arg0, %c0_i32, %c0_i32_0 : i32, i32, i32
  }
}

</mosaic_0001>

<llo_original>
// kernel: tpu_custom_call.1
$region0: #{tpu_custom_call.1}
  #allocation0 [shape = 'u32[]', space=smem, size = 0x4, offset = 0x4, fixed_abs, tag = 'smem constant byte address 0x4 - core index']
  #allocation1 [shape = 'u32[144,128]{1,0:T(1,128)}', space=vmem, size = 0x12000, scoped, tag = 'internal scratch']
  %s0 = inlined_call_operand.hbm [shape: f32[16,16,32], index: 0, kind: input, shape index: {}]
  %s1 = inlined_call_operand.vmem [shape: bf16[32,16], index: 1, kind: input, shape index: {}]
  %s2 = inlined_call_operand.vmem [shape: bf16[2,16,16], index: 2, kind: input, shape index: {}]
  %s3 = inlined_call_operand.hbm [shape: bf16[32,33], index: 3, kind: input, shape index: {}]
  %s4 = inlined_call_operand.vmem [shape: bf16[64,33], index: 4, kind: input, shape index: {}]
  %s5 = inlined_call_operand.hbm [shape: bf16[32,256], index: 5, kind: input, shape index: {}]
  %s6 = inlined_call_operand.vmem [shape: f32[32,256], index: 6, kind: input, shape index: {}]
  %s7 = inlined_call_operand.vmem [shape: f32[2,32], index: 7, kind: input, shape index: {}]
  %s8 = inlined_call_operand.hbm [shape: f32[16,16,32], index: 8, kind: output, shape index: {}]
  %s9 = sld [smem:[#allocation0]]
  $region77: #{tpu_custom_call.1} parent=0
    _
  %s11 = ssub.s32 1, %s9
  %s12 = scalar_select 0, %s11, %s9
  $region1: #{tpu_custom_call.1} parent=0
    #allocation2 [shape = 'u8[131072]{0}', space=vmem, size = 0x20000, scoped, tag = 'input window, operand 0']
    #allocation3 [shape = 's32[2]{0}', space=sflag, size = 0x8, scoped, tag = 'scoped memory for tpu_custom_call.1']
    #allocation4 [shape = 's32[2]{0}', space=sflag, size = 0x8, scoped, tag = 'scoped memory for tpu_custom_call.1']
    #allocation5 [shape = 'u8[8192]{0}', space=vmem, size = 0x2000, scoped, tag = 'input window, operand 3, single buffered']
    #allocation6 [shape = 's32[1]{0}', space=sflag, size = 0x4, scoped, tag = 'scoped memory for tpu_custom_call.1']
    #allocation7 [shape = 'u8[16384]{0}', space=vmem, size = 0x4000, scoped, tag = 'input window, operand 5, single buffered']
    #allocation8 [shape = 'u8[131072]{0}', space=vmem, size = 0x20000, scoped, tag = 'output window, operand 0']
    %13 = vsyncpa [#allocation3], 0
    %s14 = scalar_lea.sflag [#allocation3], 1
    %15 = vsyncpa %s14, 0
    %16 = vsyncpa [#allocation6], 0
    %17 = vsyncpa [#allocation4], 0
    %s18 = scalar_lea.sflag [#allocation4], 1
    %19 = vsyncpa %s18, 0
    loop: start=0, step=1, limit=4
    $region2: #{tpu_custom_call.1} parent=1 // loop_pre_header
      _
    $region3: #{tpu_custom_call.1} parent=1 // loop_header
      %s21 = sphi 0, %s25
      %p22 = scmp.ge.s32.totalorder %s21, 4
      %s31 = sphi 0, %s33
      %s34 = sphi 0, %s31
      %s35 = sphi 0, %s34
      %s51 = sphi 0, %s35
      %s55 = sphi 0, %s55
      %s57 = sphi 0, %s55
      %s58 = sphi 0, %s57
      %s72 = sphi 0, %s58
      %s76 = sphi 0, %s76
      %s78 = sphi 0, %s76
      %s79 = sphi 0, %s78
      %s93 = sphi 0, %s79
      %s97 = sphi 0, %s97
      %s99 = sphi 0, %s97
      %s100 = sphi 0, %s99
      %s114 = sphi 0, %s100
      %s118 = sphi 0, %s118
      %s120 = sphi 0, %s118
      %s121 = sphi 0, %s120
      %s135 = sphi 0, %s121
      %s139 = sphi 0, %s139
      %s141 = sphi 0, %s139
      %s142 = sphi 0, %s141
      %s156 = sphi 0, %s142
      %s160 = sphi 0, %s160
      %s162 = sphi 0, %s160
      %s163 = sphi 0, %s162
      %s177 = sphi 0, %s163
      %s181 = sphi 0, %s181
      %s183 = sphi 0, %s181
      %s184 = sphi 0, %s183
      %s198 = sphi 0, %s184
      %s204 = sphi 0, %s206
      %s207 = sphi 0, %s204
      %s208 = sphi 0, %s207
      %s224 = sphi 0, %s208
    $region4: #{tpu_custom_call.1} parent=1 // loop_header_branch
      %24 = sbr.rel (%p22) target = $region8
    $region5: #{tpu_custom_call.1} parent=1 // loop_body
      %s26 = ssub.s32 %s21, 1
      %s27 = ssub.s32 %s21, 2
      %s28 = sadd.s32 %s21, 1
      %s29 = ssub.s32 %s21, %s28
      %p30 = scmp.eq.s32.totalorder %s29, 0
      %s32 = sadd.s32 %s31, 1
      %s33 = scalar_select %p30, %s31, %s32
      %p36 = pneg %p30
      %p37 = scmp.eq.s32.totalorder %s21, 1
      %p38 = por %p36, %p37
      %p39 = scmp.ne.s32.totalorder %s31, %s34
      %p40 = scmp.eq.s32.totalorder %s21, 0
      %p41 = por %p39, %p40
      %p42 = scmp.ne.s32.totalorder %s31, %s34
      %p43 = scmp.eq.s32.totalorder %s26, 1
      %p44 = por %p42, %p43
      %p45 = scmp.ne.s32.totalorder %s34, %s35
      %p46 = scmp.eq.s32.totalorder %s26, 0
      %p47 = por %p45, %p46
      %p48 = scmp.ne.s32.totalorder %s34, %s35
      %p49 = scmp.eq.s32.totalorder %s27, 1
      %p50 = por %p48, %p49
      %p52 = scmp.ne.s32.totalorder %s35, %s51
      %p53 = scmp.eq.s32.totalorder %s27, 0
      %p54 = por %p52, %p53
      %s56 = sadd.s32 %s55, 1
      %p59 = scmp.eq.s32.totalorder %s21, 1
      %p60 = scmp.ne.s32.totalorder %s55, %s57
      %p61 = scmp.eq.s32.totalorder %s21, 0
      %p62 = por %p60, %p61
      %p63 = scmp.ne.s32.totalorder %s55, %s57
      %p64 = scmp.eq.s32.totalorder %s26, 1
      %p65 = por %p63, %p64
      %p66 = scmp.ne.s32.totalorder %s57, %s58
      %p67 = scmp.eq.s32.totalorder %s26, 0
      %p68 = por %p66, %p67
      %p69 = scmp.ne.s32.totalorder %s57, %s58
      %p70 = scmp.eq.s32.totalorder %s27, 1
      %p71 = por %p69, %p70
      %p73 = scmp.ne.s32.totalorder %s58, %s72
      %p74 = scmp.eq.s32.totalorder %s27, 0
      %p75 = por %p73, %p74
      %s77 = sadd.s32 %s76, 1
      %p80 = scmp.eq.s32.totalorder %s21, 1
      %p81 = scmp.ne.s32.totalorder %s76, %s78
      %p82 = scmp.eq.s32.totalorder %s21, 0
      %p83 = por %p81, %p82
      %p84 = scmp.ne.s32.totalorder %s76, %s78
      %p85 = scmp.eq.s32.totalorder %s26, 1
      %p86 = por %p84, %p85
      %p87 = scmp.ne.s32.totalorder %s78, %s79
      %p88 = scmp.eq.s32.totalorder %s26, 0
      %p89 = por %p87, %p88
      %p90 = scmp.ne.s32.totalorder %s78, %s79
      %p91 = scmp.eq.s32.totalorder %s27, 1
      %p92 = por %p90, %p91
      %p94 = scmp.ne.s32.totalorder %s79, %s93
      %p95 = scmp.eq.s32.totalorder %s27, 0
      %p96 = por %p94, %p95
      %s98 = sadd.s32 %s97, 1
      %p101 = scmp.eq.s32.totalorder %s21, 1
      %p102 = scmp.ne.s32.totalorder %s97, %s99
      %p103 = scmp.eq.s32.totalorder %s21, 0
      %p104 = por %p102, %p103
      %p105 = scmp.ne.s32.totalorder %s97, %s99
      %p106 = scmp.eq.s32.totalorder %s26, 1
      %p107 = por %p105, %p106
      %p108 = scmp.ne.s32.totalorder %s99, %s100
      %p109 = scmp.eq.s32.totalorder %s26, 0
      %p110 = por %p108, %p109
      %p111 = scmp.ne.s32.totalorder %s99, %s100
      %p112 = scmp.eq.s32.totalorder %s27, 1
      %p113 = por %p111, %p112
      %p115 = scmp.ne.s32.totalorder %s100, %s114
      %p116 = scmp.eq.s32.totalorder %s27, 0
      %p117 = por %p115, %p116
      %s119 = sadd.s32 %s118, 1
      %p122 = scmp.eq.s32.totalorder %s21, 1
      %p123 = scmp.ne.s32.totalorder %s118, %s120
      %p124 = scmp.eq.s32.totalorder %s21, 0
      %p125 = por %p123, %p124
      %p126 = scmp.ne.s32.totalorder %s118, %s120
      %p127 = scmp.eq.s32.totalorder %s26, 1
      %p128 = por %p126, %p127
      %p129 = scmp.ne.s32.totalorder %s120, %s121
      %p130 = scmp.eq.s32.totalorder %s26, 0
      %p131 = por %p129, %p130
      %p132 = scmp.ne.s32.totalorder %s120, %s121
      %p133 = scmp.eq.s32.totalorder %s27, 1
      %p134 = por %p132, %p133
      %p136 = scmp.ne.s32.totalorder %s121, %s135
      %p137 = scmp.eq.s32.totalorder %s27, 0
      %p138 = por %p136, %p137
      %s140 = sadd.s32 %s139, 1
      %p143 = scmp.eq.s32.totalorder %s21, 1
      %p144 = scmp.ne.s32.totalorder %s139, %s141
      %p145 = scmp.eq.s32.totalorder %s21, 0
      %p146 = por %p144, %p145
      %p147 = scmp.ne.s32.totalorder %s139, %s141
      %p148 = scmp.eq.s32.totalorder %s26, 1
      %p149 = por %p147, %p148
      %p150 = scmp.ne.s32.totalorder %s141, %s142
      %p151 = scmp.eq.s32.totalorder %s26, 0
      %p152 = por %p150, %p151
      %p153 = scmp.ne.s32.totalorder %s141, %s142
      %p154 = scmp.eq.s32.totalorder %s27, 1
      %p155 = por %p153, %p154
      %p157 = scmp.ne.s32.totalorder %s142, %s156
      %p158 = scmp.eq.s32.totalorder %s27, 0
      %p159 = por %p157, %p158
      %s161 = sadd.s32 %s160, 1
      %p164 = scmp.eq.s32.totalorder %s21, 1
      %p165 = scmp.ne.s32.totalorder %s160, %s162
      %p166 = scmp.eq.s32.totalorder %s21, 0
      %p167 = por %p165, %p166
      %p168 = scmp.ne.s32.totalorder %s160, %s162
      %p169 = scmp.eq.s32.totalorder %s26, 1
      %p170 = por %p168, %p169
      %p171 = scmp.ne.s32.totalorder %s162, %s163
      %p172 = scmp.eq.s32.totalorder %s26, 0
      %p173 = por %p171, %p172
      %p174 = scmp.ne.s32.totalorder %s162, %s163
      %p175 = scmp.eq.s32.totalorder %s27, 1
      %p176 = por %p174, %p175
      %p178 = scmp.ne.s32.totalorder %s163, %s177
      %p179 = scmp.eq.s32.totalorder %s27, 0
      %p180 = por %p178, %p179
      %s182 = sadd.s32 %s181, 1
      %p185 = scmp.eq.s32.totalorder %s21, 1
      %p186 = scmp.ne.s32.totalorder %s181, %s183
      %p187 = scmp.eq.s32.totalorder %s21, 0
      %p188 = por %p186, %p187
      %p189 = scmp.ne.s32.totalorder %s181, %s183
      %p190 = scmp.eq.s32.totalorder %s26, 1
      %p191 = por %p189, %p190
      %p192 = scmp.ne.s32.totalorder %s183, %s184
      %p193 = scmp.eq.s32.totalorder %s26, 0
      %p194 = por %p192, %p193
      %p195 = scmp.ne.s32.totalorder %s183, %s184
      %p196 = scmp.eq.s32.totalorder %s27, 1
      %p197 = por %p195, %p196
      %p199 = scmp.ne.s32.totalorder %s184, %s198
      %p200 = scmp.eq.s32.totalorder %s27, 0
      %p201 = por %p199, %p200
      %s202 = ssub.s32 %s21, %s28
      %p203 = scmp.eq.s32.totalorder %s202, 0
      %s205 = sadd.s32 %s204, 1
      %s206 = scalar_select %p203, %s204, %s205
      %p209 = pneg %p203
      %p210 = scmp.eq.s32.totalorder %s21, 1
      %p211 = por %p209, %p210
      %p212 = scmp.ne.s32.totalorder %s204, %s207
      %p213 = scmp.eq.s32.totalorder %s21, 0
      %p214 = por %p212, %p213
      %p215 = scmp.ne.s32.totalorder %s204, %s207
      %p216 = scmp.eq.s32.totalorder %s26, 1
      %p217 = por %p215, %p216
      %p218 = scmp.ne.s32.totalorder %s207, %s208
      %p219 = scmp.eq.s32.totalorder %s26, 0
      %p220 = por %p218, %p219
      %p221 = scmp.ne.s32.totalorder %s207, %s208
      %p222 = scmp.eq.s32.totalorder %s27, 1
      %p223 = por %p221, %p222
      %p225 = scmp.ne.s32.totalorder %s208, %s224
      %p226 = scmp.eq.s32.totalorder %s27, 0
      %p227 = por %p225, %p226
      %p228 = scmp.le.s32.totalorder 1, %s21
      %p229 = scmp.lt.s32.totalorder %s21, 3
      %p230 = pnand %p228, %p229
      %p231 = pneg %p230
      // Predicated region
      $region9: #{tpu_custom_call.1} parent=5 // pred_check
        _
      $region10: #{tpu_custom_call.1} parent=5 // pred_check_branch
        %233 = sbr.rel (%p230) target = $region12
      $region11: #{tpu_custom_call.1} parent=5 // pred_region
        %s234 = ssub.s32 %s21, 1
        // Predicated region
        $region13: #{tpu_custom_call.1} parent=11 // pred_check
          %p235 = pneg %p68
        $region14: #{tpu_custom_call.1} parent=11 // pred_check_branch
          %237 = sbr.rel (%p235) target = $region16
        $region15: #{tpu_custom_call.1} parent=11 // pred_region
          _
        $region16: #{tpu_custom_call.1} parent=11 // pred_fallthru
          _
        // Predicated region
        $region17: #{tpu_custom_call.1} parent=11 // pred_check
          %p238 = pneg %p89
        $region18: #{tpu_custom_call.1} parent=11 // pred_check_branch
          %240 = sbr.rel (%p238) target = $region20
        $region19: #{tpu_custom_call.1} parent=11 // pred_region
          _
        $region20: #{tpu_custom_call.1} parent=11 // pred_fallthru
          _
        // Predicated region
        $region21: #{tpu_custom_call.1} parent=11 // pred_check
          %p241 = pneg %p110
        $region22: #{tpu_custom_call.1} parent=11 // pred_check_branch
          %243 = sbr.rel (%p241) target = $region24
        $region23: #{tpu_custom_call.1} parent=11 // pred_region
          %s245 = ssub.s32 256, 256
          %246 = vsyncadd [#allocation6], %s245
          %s247 = sshll.u32 [#allocation5], 4
          %s248 = int_to_ptr.vmem [resolvable:$true] %s247
          %253 = dma.hbm_to_vmem [thread:$0]  %s3, 256, %s248, [#allocation6], 64, 64, 4
        $region24: #{tpu_custom_call.1} parent=11 // pred_fallthru
          _
        // Predicated region
        $region25: #{tpu_custom_call.1} parent=11 // pred_check
          %p254 = pneg %p131
        $region26: #{tpu_custom_call.1} parent=11 // pred_check_branch
          %256 = sbr.rel (%p254) target = $region28
        $region27: #{tpu_custom_call.1} parent=11 // pred_region
          _
        $region28: #{tpu_custom_call.1} parent=11 // pred_fallthru
          _
        // Predicated region
        $region29: #{tpu_custom_call.1} parent=11 // pred_check
          %p257 = pneg %p152
        $region30: #{tpu_custom_call.1} parent=11 // pred_check_branch
          %259 = sbr.rel (%p257) target = $region32
        $region31: #{tpu_custom_call.1} parent=11 // pred_region
          %s261 = ssub.s32 512, 512
          %262 = vsyncadd [#allocation6], %s261
          %s263 = sshll.u32 [#allocation7], 4
          %s264 = int_to_ptr.vmem [resolvable:$true] %s263
          %269 = dma.hbm_to_vmem [thread:$0]  %s5, 512, %s264, [#allocation6], 128, 128, 8
        $region32: #{tpu_custom_call.1} parent=11 // pred_fallthru
          _
        // Predicated region
        $region33: #{tpu_custom_call.1} parent=11 // pred_check
          %p270 = pneg %p173
        $region34: #{tpu_custom_call.1} parent=11 // pred_check_branch
          %272 = sbr.rel (%p270) target = $region36
        $region35: #{tpu_custom_call.1} parent=11 // pred_region
          _
        $region36: #{tpu_custom_call.1} parent=11 // pred_fallthru
          _
        // Predicated region
        $region37: #{tpu_custom_call.1} parent=11 // pred_check
          %p273 = pneg %p194
        $region38: #{tpu_custom_call.1} parent=11 // pred_check_branch
          %275 = sbr.rel (%p273) target = $region40
        $region39: #{tpu_custom_call.1} parent=11 // pred_region
          _
        $region40: #{tpu_custom_call.1} parent=11 // pred_fallthru
          _
      $region12: #{tpu_custom_call.1} parent=5 // pred_fallthru
        _
      %p276 = scmp.lt.s32.totalorder %s21, 2
      // Predicated region
      $region41: #{tpu_custom_call.1} parent=5 // pred_check
        %p277 = pneg %p276
      $region42: #{tpu_custom_call.1} parent=5 // pred_check_branch
        %279 = sbr.rel (%p277) target = $region44
      $region43: #{tpu_custom_call.1} parent=5 // pred_region
        // Predicated region
        $region45: #{tpu_custom_call.1} parent=43 // pred_check
          %p280 = pneg %p41
        $region46: #{tpu_custom_call.1} parent=43 // pred_check_branch
          %282 = sbr.rel (%p280) target = $region48
        $region47: #{tpu_custom_call.1} parent=43 // pred_region
          %s283 = sand.u32 %s31, 1
          %s284 = scalar_lea.sflag [#allocation3], %s283
          %s285 = sand.u32 %s31, 1
          %s286 = smul.addr %s285, 128
          %s287 = scalar_lea.vmem [#allocation2], %s286
          %s288 = smul.u32 8, %s21
          %s290 = ssub.s32 2048, 2048
          %291 = vsyncadd %s284, %s290
          %s292 = smul.addr %s288, 2
          %s293 = smul.addr %s292, 128
          %s294 = scalar_lea.hbm %s0, %s293
          %s295 = sshll.u32 %s287, 4
          %s296 = int_to_ptr.vmem [resolvable:$true] %s295
          %301 = dma.hbm_to_vmem [thread:$0]  %s294, 2048, %s296, %s284, 128, 128, 8
        $region48: #{tpu_custom_call.1} parent=43 // pred_fallthru
          _
      $region44: #{tpu_custom_call.1} parent=5 // pred_fallthru
        _
      %p302 = scmp.le.s32.totalorder 1, %s21
      %p303 = scmp.lt.s32.totalorder %s21, 3
      %p304 = pnand %p302, %p303
      %p305 = pneg %p304
      // Predicated region
      $region49: #{tpu_custom_call.1} parent=5 // pred_check
        _
      $region50: #{tpu_custom_call.1} parent=5 // pred_check_branch
        %307 = sbr.rel (%p304) target = $region52
      $region51: #{tpu_custom_call.1} parent=5 // pred_region
        %s308 = ssub.s32 %s21, 1
        %s309 = sand.u32 %s34, 1
        %s310 = scalar_lea.sflag [#allocation3], %s309
        %s311 = sand.u32 %s34, 1
        %s312 = smul.addr %s311, 128
        %s313 = scalar_lea.vmem [#allocation2], %s312
        // Predicated region
        $region53: #{tpu_custom_call.1} parent=51 // pred_check
          %p314 = pneg %p47
        $region54: #{tpu_custom_call.1} parent=51 // pred_check_branch
          %316 = sbr.rel (%p314) target = $region56
        $region55: #{tpu_custom_call.1} parent=51 // pred_region
          %317 = dma.done %s310, 2048
        $region56: #{tpu_custom_call.1} parent=51 // pred_fallthru
          _
        // Predicated region
        $region57: #{tpu_custom_call.1} parent=51 // pred_check
          %p318 = pneg %p110
        $region58: #{tpu_custom_call.1} parent=51 // pred_check_branch
          %320 = sbr.rel (%p318) target = $region60
        $region59: #{tpu_custom_call.1} parent=51 // pred_region
          %321 = dma.done [#allocation6], 256
        $region60: #{tpu_custom_call.1} parent=51 // pred_fallthru
          _
        // Predicated region
        $region61: #{tpu_custom_call.1} parent=51 // pred_check
          %p322 = pneg %p152
        $region62: #{tpu_custom_call.1} parent=51 // pred_check_branch
          %324 = sbr.rel (%p322) target = $region64
        $region63: #{tpu_custom_call.1} parent=51 // pred_region
          %325 = dma.done [#allocation6], 512
        $region64: #{tpu_custom_call.1} parent=51 // pred_fallthru
          _
        %s326 = sand.u32 %s34, 1
        %s327 = scalar_lea.sflag [#allocation3], %s326
        %s328 = sand.u32 %s34, 1
        %s329 = smul.addr %s328, 128
        %s330 = scalar_lea.vmem [#allocation2], %s329
        %p331 = pneg %p47
        %p332 = pneg %p44
        %p333 = pneg %p68
        %p334 = pneg %p65
        %p335 = pneg %p89
        %p336 = pneg %p86
        %p337 = pneg %p110
        %p338 = pneg %p107
        %p339 = pneg %p131
        %p340 = pneg %p128
        %p341 = pneg %p152
        %p342 = pneg %p149
        %p343 = pneg %p173
        %p344 = pneg %p170
        %p345 = pneg %p194
        %p346 = pneg %p191
        %p347 = pneg %p220
        %p348 = pneg %p217
        %s349 = sand.u32 %s207, 1
        %s350 = scalar_lea.sflag [#allocation4], %s349
        %s351 = sand.u32 %s207, 1
        %s352 = smul.addr %s351, 128
        %s353 = scalar_lea.vmem [#allocation8], %s352
        %s354 = smul.u32 8, %s26
        %s355 = smul.u32 8, %s26
        %v357 = vld [vmem:[%s313] sm:$0xff]
        %v358 = vld [vmem:[%s313 + $0x8] sm:$0xff]
        %v359 = vld [vmem:[%s313 + $0x10] sm:$0xff]
        %v360 = vld [vmem:[%s313 + $0x18] sm:$0xff]
        %v361 = vld [vmem:[%s313 + $0x20] sm:$0xff]
        %v362 = vld [vmem:[%s313 + $0x28] sm:$0xff]
        %v363 = vld [vmem:[%s313 + $0x30] sm:$0xff]
        %v364 = vld [vmem:[%s313 + $0x38] sm:$0xff]
        %v365 = vld [vmem:[%s313 + $0x40] sm:$0xff]
        %v366 = vld [vmem:[%s313 + $0x48] sm:$0xff]
        %v367 = vld [vmem:[%s313 + $0x50] sm:$0xff]
        %v368 = vld [vmem:[%s313 + $0x58] sm:$0xff]
        %v369 = vld [vmem:[%s313 + $0x60] sm:$0xff]
        %v370 = vld [vmem:[%s313 + $0x68] sm:$0xff]
        %v371 = vld [vmem:[%s313 + $0x70] sm:$0xff]
        %v372 = vld [vmem:[%s313 + $0x78] sm:$0xff]
        %375 = vrot.lane.b32.xlu0 %v359, 32
        %v376 = vpop.permute.xlu0 %375
        %377 = vrot.lane.b32.xlu0 %v360, 32
        %v378 = vpop.permute.xlu0 %377
        %383 = vrot.lane.b32.xlu0 %v361, 64
        %v384 = vpop.permute.xlu0 %383
        %385 = vrot.lane.b32.xlu0 %v362, 64
        %v386 = vpop.permute.xlu0 %385
        %391 = vrot.lane.b32.xlu0 %v363, 96
        %v392 = vpop.permute.xlu0 %391
        %393 = vrot.lane.b32.xlu0 %v364, 96
        %v394 = vpop.permute.xlu0 %393
        %399 = vrot.lane.b32.xlu0 %v367, 32
        %v400 = vpop.permute.xlu0 %399
        %401 = vrot.lane.b32.xlu0 %v368, 32
        %v402 = vpop.permute.xlu0 %401
        %407 = vrot.lane.b32.xlu0 %v369, 64
        %v408 = vpop.permute.xlu0 %407
        %409 = vrot.lane.b32.xlu0 %v370, 64
        %v410 = vpop.permute.xlu0 %409
        %415 = vrot.lane.b32.xlu0 %v371, 96
        %v416 = vpop.permute.xlu0 %415
        %417 = vrot.lane.b32.xlu0 %v372, 96
        %v418 = vpop.permute.xlu0 %417
        %vm421 = vcmask 261120
        %v422 = vsel %vm421, %v357, %v376
        %v423 = vsel %vm421, %v358, %v378
        %vm424 = vcmask 523264
        %v425 = vsel %vm424, %v422, %v384
        %v426 = vsel %vm424, %v423, %v386
        %vm427 = vcmask 785408
        %v428 = vsel %vm427, %v425, %v392
        %v429 = vsel %vm427, %v426, %v394
        %v430 = vsel %vm421, %v365, %v400
        %v431 = vsel %vm421, %v366, %v402
        %v432 = vsel %vm424, %v430, %v408
        %v433 = vsel %vm424, %v431, %v410
        %v434 = vsel %vm427, %v432, %v416
        %v435 = vsel %vm427, %v433, %v418
        %v436 = vpack.c.bf16 %v429, %v428
        %v437 = vpack.c.bf16 %v435, %v434
        %v438 = vld [vmem:[%s1] sm:$0xf]
        %v439 = vld [vmem:[%s1 + $0x4] sm:$0xf]
        %v440 = vld [vmem:[%s1 + $0x8] sm:$0xf]
        %v441 = vld [vmem:[%s1 + $0xc] sm:$0xf]
        %v446 = vunpack.c.l.b16 %v438
        %v447 = vunpack.c.l.b16 %v439
        %v448 = vunpack.c.l.b16 %v440
        %v449 = vunpack.c.l.b16 %v441
        %v450 = vpack.c.b16 %v447, %v446
        %v451 = vpack.c.b16 %v449, %v448
        %vm452 = vcmask 130048
        %v454 = vsel %vm452, %v450, 0
        %v457 = vsel %vm452, %v451, 0
        %459 = vmatprep.subr.bf16.mxu0 0
        %460 = vmatpush1.bf16.msra.mxu0 0
        %461 = vmatprep.subr.bf16.mxu0 0
        %462 = vmatpush1.bf16.msra.mxu0 0
        %463 = vmatprep.subr.bf16.mxu0 0
        %464 = vmatpush1.bf16.msra.mxu0 0
        %465 = vmatprep.subr.bf16.mxu0 0
        %466 = vmatpush1.bf16.msra.mxu0 0
        %467 = vmatprep.subr.bf16.mxu0 0
        %468 = vmatpush1.bf16.msra.mxu0 0
        %469 = vmatprep.subr.bf16.mxu0 0
        %470 = vmatpush1.bf16.msra.mxu0 0
        %471 = vmatprep.subr.bf16.mxu0 0
        %472 = vmatpush1.bf16.msra.mxu0 0
        %473 = vmatprep.subr.bf16.mxu0 %v437
        %474 = vmatpush1.bf16.msra.mxu0 %v436
        %475 = vmatprep.subr.bf16.mxu0 0
        %476 = vmatpush2.bf16.msra.mxu0 0
        %477 = vmatprep.subr.bf16.mxu0 0
        %478 = vmatpush2.bf16.msra.mxu0 0
        %479 = vmatprep.subr.bf16.mxu0 0
        %480 = vmatpush2.bf16.msra.mxu0 0
        %481 = vmatprep.subr.bf16.mxu0 0
        %482 = vmatpush2.bf16.msra.mxu0 0
        %483 = vmatprep.subr.bf16.mxu0 0
        %484 = vmatpush2.bf16.msra.mxu0 0
        %485 = vmatprep.subr.bf16.mxu0 0
        %486 = vmatpush2.bf16.msra.mxu0 0
        %487 = vmatprep.subr.bf16.mxu0 0
        %488 = vmatpush2.bf16.msra.mxu0 0
        %489 = vmatprep.subr.bf16.mxu0 0
        %490 = vmatpush2.bf16.msra.mxu0 0
        %491 = vmatprep.mubr.bf16.mxu0 0
        %492 = vmatmul.mubr.bf16.gmra.mxu0 %v454
        %v493 = vpop.f32.mrf.mxu0
        %v494 = vadd.f32 0.0, %v493
        %v495 = vpop.f32.mrf.mxu0
        %v496 = vadd.f32 0.0, %v495
        %v497 = vpop.f32.mrf.mxu0
        %v498 = vadd.f32 0.0, %v497
        %v499 = vpop.f32.mrf.mxu0
        %v500 = vadd.f32 0.0, %v499
        %501 = vmatprep.mubr.bf16.mxu0 0
        %502 = vmatmul.mubr.bf16.gmra.mxu0 %v457
        %v503 = vpop.f32.mrf.mxu0
        %v504 = vadd.f32 0.0, %v503
        %v505 = vpop.f32.mrf.mxu0
        %v506 = vadd.f32 0.0, %v505
        %v507 = vpop.f32.mrf.mxu0
        %v508 = vadd.f32 0.0, %v507
        %v509 = vpop.f32.mrf.mxu0
        %v510 = vadd.f32 0.0, %v509
        %511 = vdwg.mxu0
        %v512 = vsel %vm421, %v357, 0.0
        %v513 = vsel %vm421, %v358, 0.0
        %v514 = vadd.f32 %v512, %v513
        %v515 = vrot.slane %v514, 4
        %v516 = vadd.f32 %v514, %v515
        %v517 = vrot.slane %v516, 2
        %v518 = vadd.f32 %v516, %v517
        %v519 = vrot.slane %v518, 1
        %v520 = vadd.f32 %v518, %v519
        %v521 = vsel %vm421, %v359, 0.0
        %v522 = vsel %vm421, %v360, 0.0
        %v523 = vadd.f32 %v521, %v522
        %v524 = vrot.slane %v523, 4
        %v525 = vadd.f32 %v523, %v524
        %v526 = vrot.slane %v525, 2
        %v527 = vadd.f32 %v525, %v526
        %v528 = vrot.slane %v527, 1
        %v529 = vadd.f32 %v527, %v528
        %v530 = vsel %vm421, %v361, 0.0
        %v531 = vsel %vm421, %v362, 0.0
        %v532 = vadd.f32 %v530, %v531
        %v533 = vrot.slane %v532, 4
        %v534 = vadd.f32 %v532, %v533
        %v535 = vrot.slane %v534, 2
        %v536 = vadd.f32 %v534, %v535
        %v537 = vrot.slane %v536, 1
        %v538 = vadd.f32 %v536, %v537
        %v539 = vsel %vm421, %v363, 0.0
        %v540 = vsel %vm421, %v364, 0.0
        %v541 = vadd.f32 %v539, %v540
        %v542 = vrot.slane %v541, 4
        %v543 = vadd.f32 %v541, %v542
        %v544 = vrot.slane %v543, 2
        %v545 = vadd.f32 %v543, %v544
        %v546 = vrot.slane %v545, 1
        %v547 = vadd.f32 %v545, %v546
        %v548 = vsel %vm421, %v365, 0.0
        %v549 = vsel %vm421, %v366, 0.0
        %v550 = vadd.f32 %v548, %v549
        %v551 = vrot.slane %v550, 4
        %v552 = vadd.f32 %v550, %v551
        %v553 = vrot.slane %v552, 2
        %v554 = vadd.f32 %v552, %v553
        %v555 = vrot.slane %v554, 1
        %v556 = vadd.f32 %v554, %v555
        %v557 = vsel %vm421, %v367, 0.0
        %v558 = vsel %vm421, %v368, 0.0
        %v559 = vadd.f32 %v557, %v558
        %v560 = vrot.slane %v559, 4
        %v561 = vadd.f32 %v559, %v560
        %v562 = vrot.slane %v561, 2
        %v563 = vadd.f32 %v561, %v562
        %v564 = vrot.slane %v563, 1
        %v565 = vadd.f32 %v563, %v564
        %v566 = vsel %vm421, %v369, 0.0
        %v567 = vsel %vm421, %v370, 0.0
        %v568 = vadd.f32 %v566, %v567
        %v569 = vrot.slane %v568, 4
        %v570 = vadd.f32 %v568, %v569
        %v571 = vrot.slane %v570, 2
        %v572 = vadd.f32 %v570, %v571
        %v573 = vrot.slane %v572, 1
        %v574 = vadd.f32 %v572, %v573
        %v575 = vsel %vm421, %v371, 0.0
        %v576 = vsel %vm421, %v372, 0.0
        %v577 = vadd.f32 %v575, %v576
        %v578 = vrot.slane %v577, 4
        %v579 = vadd.f32 %v577, %v578
        %v580 = vrot.slane %v579, 2
        %v581 = vadd.f32 %v579, %v580
        %v582 = vrot.slane %v581, 1
        %v583 = vadd.f32 %v581, %v582
        %v584 = vrcp.pop 16.0
        %v585 = vmul.f32 %v520, %v584
        %v586 = vmul.f32 %v529, %v584
        %v587 = vmul.f32 %v538, %v584
        %v588 = vmul.f32 %v547, %v584
        %v589 = vmul.f32 %v556, %v584
        %v590 = vmul.f32 %v565, %v584
        %v591 = vmul.f32 %v574, %v584
        %v592 = vmul.f32 %v583, %v584
        %vm601 = vcmask 1041409
        %v602 = vsel %vm601, %v586, %v585
        %vm603 = vcmask 1042434
        %v604 = vsel %vm603, %v587, %v602
        %vm605 = vcmask 1043459
        %v606 = vsel %vm605, %v588, %v604
        %vm607 = vcmask 1044484
        %v608 = vsel %vm607, %v589, %v606
        %vm609 = vcmask 1045509
        %v610 = vsel %vm609, %v590, %v608
        %vm611 = vcmask 1046534
        %v612 = vsel %vm611, %v591, %v610
        %vm613 = vcmask 1047559
        %v614 = vsel %vm613, %v592, %v612
        %616 = vxpose.xlu0.b32.start [1/16] %v614, 128
        %617 = vxpose.xlu0.b32.cont [2/16] 0.0, 128
        %618 = vxpose.xlu0.b32.cont [3/16] 0.0, 128
        %619 = vxpose.xlu0.b32.cont [4/16] 0.0, 128
        %620 = vxpose.xlu0.b32.cont [5/16] 0.0, 128
        %621 = vxpose.xlu0.b32.cont [6/16] 0.0, 128
        %622 = vxpose.xlu0.b32.cont [7/16] 0.0, 128
        %623 = vxpose.xlu0.b32.cont [8/16] 0.0, 128
        %624 = vxpose.xlu0.b32.cont [9/16] 0.0, 128
        %625 = vxpose.xlu0.b32.cont [10/16] 0.0, 128
        %626 = vxpose.xlu0.b32.cont [11/16] 0.0, 128
        %627 = vxpose.xlu0.b32.cont [12/16] 0.0, 128
        %628 = vxpose.xlu0.b32.cont [13/16] 0.0, 128
        %629 = vxpose.xlu0.b32.cont [14/16] 0.0, 128
        %630 = vxpose.xlu0.b32.cont [15/16] 0.0, 128
        %631 = vxpose.xlu0.b32.end [16/16] 0.0, 128
        %v632 = vpop.trf.xlu0
        %v633 = vpop.trf.xlu0
        %v634 = vpop.trf.xlu0
        %v635 = vpop.trf.xlu0
        %v636 = vpop.trf.xlu0
        %v637 = vpop.trf.xlu0
        %v638 = vpop.trf.xlu0
        %v639 = vpop.trf.xlu0
        %v640 = vpop.trf.xlu0
        %v641 = vpop.trf.xlu0
        %v642 = vpop.trf.xlu0
        %v643 = vpop.trf.xlu0
        %v644 = vpop.trf.xlu0
        %v645 = vpop.trf.xlu0
        %v646 = vpop.trf.xlu0
        %v647 = vpop.trf.xlu0
        %v648 = vpack.c.bf16 %v633, %v632
        %v649 = vpack.c.bf16 %v635, %v634
        %v650 = vpack.c.bf16 1.0, 1.0
        %v651 = vld [vmem:[#allocation5] sm:$0xf]
        %v652 = vld [vmem:[#allocation5 + $0x4] sm:$0xf]
        %v653 = vld [vmem:[#allocation5 + $0x8] sm:$0xf]
        %v654 = vld [vmem:[#allocation5 + $0xc] sm:$0xf]
        %v659 = vunpack.c.l.b16 %v651
        %v660 = vunpack.c.l.b16 %v652
        %v661 = vunpack.c.l.b16 %v653
        %v662 = vunpack.c.l.b16 %v654
        %v663 = vpack.c.b16 %v660, %v659
        %v664 = vpack.c.b16 %v662, %v661
        %vm665 = vcmask 269312
        %v667 = vsel %vm665, %v663, 0
        %v670 = vsel %vm665, %v664, 0
        %vm672 = vcmask 1040384
        %v673 = vsel 0, 4294967295, 65535
        %v674 = vsel %vm672, %v673, 0
        %v676 = vand.u32 %v650, %v674
        %678 = vmatprep.subr.bf16.mxu0 0
        %679 = vmatpush1.bf16.msra.mxu0 0
        %680 = vmatprep.subr.bf16.mxu0 0
        %681 = vmatpush1.bf16.msra.mxu0 0
        %682 = vmatprep.subr.bf16.mxu0 0
        %683 = vmatpush1.bf16.msra.mxu0 0
        %684 = vmatprep.subr.bf16.mxu0 0
        %685 = vmatpush1.bf16.msra.mxu0 0
        %686 = vmatprep.subr.bf16.mxu0 0
        %687 = vmatpush1.bf16.msra.mxu0 0
        %688 = vmatprep.subr.bf16.mxu0 0
        %689 = vmatpush1.bf16.msra.mxu0 %v676
        %690 = vmatprep.subr.bf16.mxu0 0
        %691 = vmatpush1.bf16.msra.mxu0 %v649
        %692 = vmatprep.subr.bf16.mxu0 0
        %693 = vmatpush1.bf16.msra.mxu0 %v648
        %694 = vmatprep.subr.bf16.mxu0 0
        %695 = vmatpush2.bf16.msra.mxu0 0
        %696 = vmatprep.subr.bf16.mxu0 0
        %697 = vmatpush2.bf16.msra.mxu0 0
        %698 = vmatprep.subr.bf16.mxu0 0
        %699 = vmatpush2.bf16.msra.mxu0 0
        %700 = vmatprep.subr.bf16.mxu0 0
        %701 = vmatpush2.bf16.msra.mxu0 0
        %702 = vmatprep.subr.bf16.mxu0 0
        %703 = vmatpush2.bf16.msra.mxu0 0
        %704 = vmatprep.subr.bf16.mxu0 0
        %705 = vmatpush2.bf16.msra.mxu0 0
        %706 = vmatprep.subr.bf16.mxu0 0
        %707 = vmatpush2.bf16.msra.mxu0 0
        %708 = vmatprep.subr.bf16.mxu0 0
        %709 = vmatpush2.bf16.msra.mxu0 0
        %710 = vmatprep.mubr.bf16.mxu0 0
        %711 = vmatmul.mubr.bf16.gmra.mxu0 %v667
        %v712 = vpop.f32.mrf.mxu0
        %v713 = vadd.f32 0.0, %v712
        %v714 = vpop.f32.mrf.mxu0
        %v715 = vpop.f32.mrf.mxu0
        %v716 = vadd.f32 0.0, %v715
        %v717 = vpop.f32.mrf.mxu0
        %718 = vmatprep.mubr.bf16.mxu0 0
        %719 = vmatmul.mubr.bf16.gmra.mxu0 %v670
        %v720 = vpop.f32.mrf.mxu0
        %v721 = vadd.f32 0.0, %v720
        %v722 = vpop.f32.mrf.mxu0
        %v723 = vpop.f32.mrf.mxu0
        %v724 = vadd.f32 0.0, %v723
        %v725 = vpop.f32.mrf.mxu0
        %726 = vdwg.mxu0
        %v727 = vmul.f32 %v713, %v713
        %v728 = vmul.f32 %v716, %v716
        %v729 = vmul.f32 %v721, %v721
        %v730 = vmul.f32 %v724, %v724
        %v731 = vmul.f32 %v713, %v727
        %v732 = vmul.f32 %v716, %v728
        %v733 = vmul.f32 %v721, %v729
        %v734 = vmul.f32 %v724, %v730
        %v735 = vmul.f32 %v731, 0.044715
        %v736 = vmul.f32 %v732, 0.044715
        %v737 = vmul.f32 %v733, 0.044715
        %v738 = vmul.f32 %v734, 0.044715
        %v739 = vadd.f32 %v713, %v735
        %v740 = vadd.f32 %v716, %v736
        %v741 = vadd.f32 %v721, %v737
        %v742 = vadd.f32 %v724, %v738
        %v743 = vmul.f32 %v739, 0.7978846
        %v744 = vmul.f32 %v740, 0.7978846
        %v745 = vmul.f32 %v741, 0.7978846
        %v746 = vmul.f32 %v742, 0.7978846
        %v747 = vtanh.pop %v743
        %v748 = vtanh.pop %v744
        %v749 = vtanh.pop %v745
        %v750 = vtanh.pop %v746
        %v751 = vadd.f32 %v747, 1.0
        %v752 = vadd.f32 %v748, 1.0
        %v753 = vadd.f32 %v749, 1.0
        %v754 = vadd.f32 %v750, 1.0
        %v755 = vmul.f32 %v751, 0.5
        %v756 = vmul.f32 %v752, 0.5
        %v757 = vmul.f32 %v753, 0.5
        %v758 = vmul.f32 %v754, 0.5
        %v759 = vmul.f32 %v713, %v755
        %v760 = vmul.f32 %v716, %v756
        %v761 = vmul.f32 %v721, %v757
        %v762 = vmul.f32 %v724, %v758
        %v763 = vpack.c.bf16 %v760, %v759
        %v764 = vpack.c.bf16 %v762, %v761
        %v765 = vld [vmem:[%s4] sm:$0xf]
        %v766 = vld [vmem:[%s4 + $0x4] sm:$0xf]
        %v767 = vld [vmem:[%s4 + $0x8] sm:$0xf]
        %v768 = vld [vmem:[%s4 + $0xc] sm:$0xf]
        %v769 = vld [vmem:[%s4 + $0x10] sm:$0xf]
        %v770 = vld [vmem:[%s4 + $0x14] sm:$0xf]
        %v771 = vld [vmem:[%s4 + $0x18] sm:$0xf]
        %v772 = vld [vmem:[%s4 + $0x1c] sm:$0xf]
        %v781 = vunpack.c.l.b16 %v765
        %v782 = vunpack.c.l.b16 %v766
        %v783 = vunpack.c.l.b16 %v767
        %v784 = vunpack.c.l.b16 %v768
        %v785 = vunpack.c.l.b16 %v769
        %v786 = vunpack.c.l.b16 %v770
        %v787 = vunpack.c.l.b16 %v771
        %v788 = vunpack.c.l.b16 %v772
        %v789 = vpack.c.b16 %v782, %v781
        %v790 = vpack.c.b16 %v784, %v783
        %v791 = vpack.c.b16 %v786, %v785
        %v792 = vpack.c.b16 %v788, %v787
        %v794 = vsel %vm665, %v789, 0
        %v797 = vsel %vm665, %v790, 0
        %v800 = vsel %vm665, %v791, 0
        %v803 = vsel %vm665, %v792, 0
        %805 = vmatprep.subr.bf16.mxu0 0
        %806 = vmatpush1.bf16.msra.mxu0 0
        %807 = vmatprep.subr.bf16.mxu0 0
        %808 = vmatpush1.bf16.msra.mxu0 0
        %809 = vmatprep.subr.bf16.mxu0 0
        %810 = vmatpush1.bf16.msra.mxu0 0
        %811 = vmatprep.subr.bf16.mxu0 0
        %812 = vmatpush1.bf16.msra.mxu0 0
        %813 = vmatprep.subr.bf16.mxu0 0
        %814 = vmatpush1.bf16.msra.mxu0 0
        %815 = vmatprep.subr.bf16.mxu0 0
        %816 = vmatpush1.bf16.msra.mxu0 %v676
        %817 = vmatprep.subr.bf16.mxu0 0
        %818 = vmatpush1.bf16.msra.mxu0 %v764
        %819 = vmatprep.subr.bf16.mxu0 0
        %820 = vmatpush1.bf16.msra.mxu0 %v763
        %821 = vmatprep.subr.bf16.mxu0 0
        %822 = vmatpush2.bf16.msra.mxu0 0
        %823 = vmatprep.subr.bf16.mxu0 0
        %824 = vmatpush2.bf16.msra.mxu0 0
        %825 = vmatprep.subr.bf16.mxu0 0
        %826 = vmatpush2.bf16.msra.mxu0 0
        %827 = vmatprep.subr.bf16.mxu0 0
        %828 = vmatpush2.bf16.msra.mxu0 0
        %829 = vmatprep.subr.bf16.mxu0 0
        %830 = vmatpush2.bf16.msra.mxu0 0
        %831 = vmatprep.subr.bf16.mxu0 0
        %832 = vmatpush2.bf16.msra.mxu0 0
        %833 = vmatprep.subr.bf16.mxu0 0
        %834 = vmatpush2.bf16.msra.mxu0 0
        %835 = vmatprep.subr.bf16.mxu0 0
        %836 = vmatpush2.bf16.msra.mxu0 0
        %837 = vmatprep.mubr.bf16.mxu0 0
        %838 = vmatmul.mubr.bf16.gmra.mxu0 %v794
        %v839 = vpop.f32.mrf.mxu0
        %v840 = vadd.f32 0.0, %v839
        %v841 = vpop.f32.mrf.mxu0
        %v842 = vpop.f32.mrf.mxu0
        %v843 = vadd.f32 0.0, %v842
        %v844 = vpop.f32.mrf.mxu0
        %845 = vmatprep.mubr.bf16.mxu0 0
        %846 = vmatmul.mubr.bf16.gmra.mxu0 %v797
        %v847 = vpop.f32.mrf.mxu0
        %v848 = vadd.f32 0.0, %v847
        %v849 = vpop.f32.mrf.mxu0
        %v850 = vpop.f32.mrf.mxu0
        %v851 = vadd.f32 0.0, %v850
        %v852 = vpop.f32.mrf.mxu0
        %853 = vmatprep.mubr.bf16.mxu0 0
        %854 = vmatmul.mubr.bf16.gmra.mxu0 %v800
        %v855 = vpop.f32.mrf.mxu0
        %v856 = vadd.f32 0.0, %v855
        %v857 = vpop.f32.mrf.mxu0
        %v858 = vpop.f32.mrf.mxu0
        %v859 = vadd.f32 0.0, %v858
        %v860 = vpop.f32.mrf.mxu0
        %861 = vmatprep.mubr.bf16.mxu0 0
        %862 = vmatmul.mubr.bf16.gmra.mxu0 %v803
        %v863 = vpop.f32.mrf.mxu0
        %v864 = vadd.f32 0.0, %v863
        %v865 = vpop.f32.mrf.mxu0
        %v866 = vpop.f32.mrf.mxu0
        %v867 = vadd.f32 0.0, %v866
        %v868 = vpop.f32.mrf.mxu0
        %869 = vdwg.mxu0
        %v870 = vtanh.pop %v840
        %v871 = vtanh.pop %v843
        %v872 = vtanh.pop %v848
        %v873 = vtanh.pop %v851
        %v874 = vtanh.pop %v856
        %v875 = vtanh.pop %v859
        %v876 = vtanh.pop %v864
        %v877 = vtanh.pop %v867
        %880 = vrot.lane.b32.xlu0 %v872, 8
        %v881 = vpop.permute.xlu0 %880
        %882 = vrot.lane.b32.xlu0 %v873, 8
        %v883 = vpop.permute.xlu0 %882
        %888 = vrot.lane.b32.xlu0 %v874, 16
        %v889 = vpop.permute.xlu0 %888
        %890 = vrot.lane.b32.xlu0 %v875, 16
        %v891 = vpop.permute.xlu0 %890
        %896 = vrot.lane.b32.xlu0 %v876, 24
        %v897 = vpop.permute.xlu0 %896
        %898 = vrot.lane.b32.xlu0 %v877, 24
        %v899 = vpop.permute.xlu0 %898
        %vm902 = vcmask 64512
        %v903 = vsel %vm902, %v870, %v881
        %v904 = vsel %vm902, %v871, %v883
        %v905 = vsel %vm452, %v903, %v889
        %v906 = vsel %vm452, %v904, %v891
        %vm907 = vcmask 195584
        %v908 = vsel %vm907, %v905, %v897
        %v909 = vsel %vm907, %v906, %v899
        %v910 = vpack.c.bf16 %v909, %v908
        %v911 = vld [vmem:[%s6] sm:$0xff]
        %v912 = vld [vmem:[%s6 + $0x8] sm:$0xff]
        %v913 = vld [vmem:[%s6 + $0x10] sm:$0xff]
        %v914 = vld [vmem:[%s6 + $0x18] sm:$0xff]
        %v915 = vld [vmem:[%s6 + $0x20] sm:$0xff]
        %v916 = vld [vmem:[%s6 + $0x28] sm:$0xff]
        %v917 = vld [vmem:[%s6 + $0x30] sm:$0xff]
        %v918 = vld [vmem:[%s6 + $0x38] sm:$0xff]
        %v919 = vld [vmem:[#allocation7] sm:$0xff]
        %v920 = vld [vmem:[#allocation7 + $0x8] sm:$0xff]
        %v921 = vld [vmem:[#allocation7 + $0x10] sm:$0xff]
        %v922 = vld [vmem:[#allocation7 + $0x18] sm:$0xff]
        %v927 = vunpack.c.l.b16 %v919
        %v928 = vunpack.c.h.b16 %v919
        %v929 = vunpack.c.l.b16 %v920
        %v930 = vunpack.c.h.b16 %v920
        %v931 = vunpack.c.l.b16 %v921
        %v932 = vunpack.c.h.b16 %v921
        %v933 = vunpack.c.l.b16 %v922
        %v934 = vunpack.c.h.b16 %v922
        %v935 = vpack.c.b16 %v929, %v927
        %v936 = vpack.c.b16 %v930, %v928
        %v937 = vpack.c.b16 %v933, %v931
        %v938 = vpack.c.b16 %v934, %v932
        %v944 = vsel %vm421, %v910, 0
        %946 = vmatprep.subr.bf16.mxu0 0
        %947 = vmatpush1.bf16.msra.mxu0 0
        %948 = vmatprep.subr.bf16.mxu0 0
        %949 = vmatpush1.bf16.msra.mxu0 0
        %950 = vmatprep.subr.bf16.mxu0 0
        %951 = vmatpush1.bf16.msra.mxu0 0
        %952 = vmatprep.subr.bf16.mxu0 0
        %953 = vmatpush1.bf16.msra.mxu0 0
        %954 = vmatprep.subr.bf16.mxu0 0
        %955 = vmatpush1.bf16.msra.mxu0 0
        %956 = vmatprep.subr.bf16.mxu0 0
        %957 = vmatpush1.bf16.msra.mxu0 0
        %958 = vmatprep.subr.bf16.mxu0 %v938
        %959 = vmatpush1.bf16.msra.mxu0 %v937
        %960 = vmatprep.subr.bf16.mxu0 %v936
        %961 = vmatpush1.bf16.msra.mxu0 %v935
        %962 = vmatprep.subr.bf16.mxu0 0
        %963 = vmatpush2.bf16.msra.mxu0 0
        %964 = vmatprep.subr.bf16.mxu0 0
        %965 = vmatpush2.bf16.msra.mxu0 0
        %966 = vmatprep.subr.bf16.mxu0 0
        %967 = vmatpush2.bf16.msra.mxu0 0
        %968 = vmatprep.subr.bf16.mxu0 0
        %969 = vmatpush2.bf16.msra.mxu0 0
        %970 = vmatprep.subr.bf16.mxu0 0
        %971 = vmatpush2.bf16.msra.mxu0 0
        %972 = vmatprep.subr.bf16.mxu0 0
        %973 = vmatpush2.bf16.msra.mxu0 0
        %974 = vmatprep.subr.bf16.mxu0 0
        %975 = vmatpush2.bf16.msra.mxu0 0
        %976 = vmatprep.subr.bf16.mxu0 0
        %977 = vmatpush2.bf16.msra.mxu0 0
        %978 = vmatprep.mubr.bf16.mxu0 0
        %979 = vmatmul.mubr.bf16.gmra.mxu0 %v944
        %v980 = vpop.f32.mrf.mxu0
        %v981 = vadd.f32 0.0, %v980
        %v982 = vpop.f32.mrf.mxu0
        %v983 = vadd.f32 0.0, %v982
        %v984 = vpop.f32.mrf.mxu0
        %v985 = vadd.f32 0.0, %v984
        %v986 = vpop.f32.mrf.mxu0
        %v987 = vadd.f32 0.0, %v986
        %988 = vdwg.mxu0
        %v989 = vadd.f32 %v911, %v981
        %v990 = vadd.f32 %v912, %v983
        %v991 = vadd.f32 %v913, %v985
        %v992 = vadd.f32 %v914, %v987
        %v993 = vmul.f32 %v494, %v989
        %v994 = vmul.f32 %v496, %v990
        %v995 = vmul.f32 %v498, %v991
        %v996 = vmul.f32 %v500, %v992
        %v997 = vmul.f32 %v504, %v989
        %v998 = vmul.f32 %v506, %v990
        %v999 = vmul.f32 %v508, %v991
        %v1000 = vmul.f32 %v510, %v992
        %v1001 = vmul.f32 %v993, %v993
        %v1002 = vmul.f32 %v994, %v994
        %v1003 = vmul.f32 %v995, %v995
        %v1004 = vmul.f32 %v996, %v996
        %v1005 = vmul.f32 %v997, %v997
        %v1006 = vmul.f32 %v998, %v998
        %v1007 = vmul.f32 %v999, %v999
        %v1008 = vmul.f32 %v1000, %v1000
        %v1009 = vadd.f32 %v1001, %v1005
        %v1010 = vadd.f32 %v1002, %v1006
        %v1011 = vadd.f32 %v1003, %v1007
        %v1012 = vadd.f32 %v1004, %v1008
        %v1013 = vrsqrt.pop %v1009
        %v1014 = vmul.f32 %v1009, %v1013
        %vm1015 = vcmp.eq.f32.partialorder %v1009, inf
        %v1016 = vsel %vm1015, %v1009, %v1014
        %vm1017 = vcmp.eq.f32.partialorder %v1009, 0.0
        %v1018 = vand.u32 %v1009, 2147483648
        %v1019 = vsel %vm1017, %v1018, %v1016
        %v1020 = vrsqrt.pop %v1010
        %v1021 = vmul.f32 %v1010, %v1020
        %vm1022 = vcmp.eq.f32.partialorder %v1010, inf
        %v1023 = vsel %vm1022, %v1010, %v1021
        %vm1024 = vcmp.eq.f32.partialorder %v1010, 0.0
        %v1025 = vand.u32 %v1010, 2147483648
        %v1026 = vsel %vm1024, %v1025, %v1023
        %v1027 = vrsqrt.pop %v1011
        %v1028 = vmul.f32 %v1011, %v1027
        %vm1029 = vcmp.eq.f32.partialorder %v1011, inf
        %v1030 = vsel %vm1029, %v1011, %v1028
        %vm1031 = vcmp.eq.f32.partialorder %v1011, 0.0
        %v1032 = vand.u32 %v1011, 2147483648
        %v1033 = vsel %vm1031, %v1032, %v1030
        %v1034 = vrsqrt.pop %v1012
        %v1035 = vmul.f32 %v1012, %v1034
        %vm1036 = vcmp.eq.f32.partialorder %v1012, inf
        %v1037 = vsel %vm1036, %v1012, %v1035
        %vm1038 = vcmp.eq.f32.partialorder %v1012, 0.0
        %v1039 = vand.u32 %v1012, 2147483648
        %v1040 = vsel %vm1038, %v1039, %v1037
        %v1041 = vadd.f32 %v1019, %v915
        %v1042 = vadd.f32 %v1026, %v916
        %v1043 = vadd.f32 %v1033, %v917
        %v1044 = vadd.f32 %v1040, %v918
        %v1045 = vmax.f32 %v1041, 0.0
        %v1046 = vmax.f32 %v1042, 0.0
        %v1047 = vmax.f32 %v1043, 0.0
        %v1048 = vmax.f32 %v1044, 0.0
        %v1049 = vmax.f32 %v1019, 0.001
        %v1050 = vmax.f32 %v1026, 0.001
        %v1051 = vmax.f32 %v1033, 0.001
        %v1052 = vmax.f32 %v1040, 0.001
        %v1053 = vrcp.pop %v1049
        %v1054 = vrcp.pop %v1050
        %v1055 = vrcp.pop %v1051
        %v1056 = vrcp.pop %v1052
        %v1057 = vmul.f32 %v1045, %v1053
        %v1058 = vmul.f32 %v1046, %v1054
        %v1059 = vmul.f32 %v1047, %v1055
        %v1060 = vmul.f32 %v1048, %v1056
        %v1061 = vmul.f32 %v993, %v1057
        %v1062 = vmul.f32 %v994, %v1058
        %v1063 = vmul.f32 %v995, %v1059
        %v1064 = vmul.f32 %v996, %v1060
        %v1065 = vpack.c.bf16 %v1063, %v1061
        %v1066 = vpack.c.bf16 %v1064, %v1062
        %v1067 = vmul.f32 %v997, %v1057
        %v1068 = vmul.f32 %v998, %v1058
        %v1069 = vmul.f32 %v999, %v1059
        %v1070 = vmul.f32 %v1000, %v1060
        %v1071 = vpack.c.bf16 %v1069, %v1067
        %v1072 = vpack.c.bf16 %v1070, %v1068
        %v1073 = vld [vmem:[%s2] sm:$0xf]
        %v1074 = vld [vmem:[%s2 + $0x4] sm:$0xf]
        %v1075 = vld [vmem:[%s2 + $0x8] sm:$0xf]
        %v1076 = vld [vmem:[%s2 + $0xc] sm:$0xf]
        %v1079 = vunpack.c.l.b16 %v1075
        %v1080 = vunpack.c.l.b16 %v1076
        %v1081 = vpack.c.b16 %v1080, %v1079
        %v1083 = vsel %vm452, %v1081, 0
        %1085 = vmatprep.subr.bf16.mxu0 0
        %1086 = vmatpush1.bf16.msra.mxu0 0
        %1087 = vmatprep.subr.bf16.mxu0 0
        %1088 = vmatpush1.bf16.msra.mxu0 0
        %1089 = vmatprep.subr.bf16.mxu0 0
        %1090 = vmatpush1.bf16.msra.mxu0 0
        %1091 = vmatprep.subr.bf16.mxu0 0
        %1092 = vmatpush1.bf16.msra.mxu0 0
        %1093 = vmatprep.subr.bf16.mxu0 0
        %1094 = vmatpush1.bf16.msra.mxu0 0
        %1095 = vmatprep.subr.bf16.mxu0 0
        %1096 = vmatpush1.bf16.msra.mxu0 0
        %1097 = vmatprep.subr.bf16.mxu0 0
        %1098 = vmatpush1.bf16.msra.mxu0 0
        %1099 = vmatprep.subr.bf16.mxu0 %v1072
        %1100 = vmatpush1.bf16.msra.mxu0 %v1071
        %1101 = vmatprep.subr.bf16.mxu0 0
        %1102 = vmatpush2.bf16.msra.mxu0 0
        %1103 = vmatprep.subr.bf16.mxu0 0
        %1104 = vmatpush2.bf16.msra.mxu0 0
        %1105 = vmatprep.subr.bf16.mxu0 0
        %1106 = vmatpush2.bf16.msra.mxu0 0
        %1107 = vmatprep.subr.bf16.mxu0 0
        %1108 = vmatpush2.bf16.msra.mxu0 0
        %1109 = vmatprep.subr.bf16.mxu0 0
        %1110 = vmatpush2.bf16.msra.mxu0 0
        %1111 = vmatprep.subr.bf16.mxu0 0
        %1112 = vmatpush2.bf16.msra.mxu0 0
        %1113 = vmatprep.subr.bf16.mxu0 0
        %1114 = vmatpush2.bf16.msra.mxu0 0
        %1115 = vmatprep.subr.bf16.mxu0 0
        %1116 = vmatpush2.bf16.msra.mxu0 0
        %1117 = vmatprep.mubr.bf16.mxu0 0
        %1118 = vmatmul.mubr.bf16.gmra.mxu0 %v1083
        %v1119 = vpop.f32.mrf.mxu0
        %v1120 = vadd.f32 0.0, %v1119
        %v1121 = vpop.f32.mrf.mxu0
        %v1122 = vadd.f32 0.0, %v1121
        %v1123 = vpop.f32.mrf.mxu0
        %v1124 = vadd.f32 0.0, %v1123
        %v1125 = vpop.f32.mrf.mxu0
        %v1126 = vadd.f32 0.0, %v1125
        %1127 = vdwg.mxu0
        %v1130 = vunpack.c.l.b16 %v1073
        %v1131 = vunpack.c.l.b16 %v1074
        %v1132 = vpack.c.b16 %v1131, %v1130
        %v1134 = vsel %vm452, %v1132, 0
        %1136 = vmatprep.subr.bf16.mxu0 0
        %1137 = vmatpush1.bf16.msra.mxu0 0
        %1138 = vmatprep.subr.bf16.mxu0 0
        %1139 = vmatpush1.bf16.msra.mxu0 0
        %1140 = vmatprep.subr.bf16.mxu0 0
        %1141 = vmatpush1.bf16.msra.mxu0 0
        %1142 = vmatprep.subr.bf16.mxu0 0
        %1143 = vmatpush1.bf16.msra.mxu0 0
        %1144 = vmatprep.subr.bf16.mxu0 0
        %1145 = vmatpush1.bf16.msra.mxu0 0
        %1146 = vmatprep.subr.bf16.mxu0 0
        %1147 = vmatpush1.bf16.msra.mxu0 0
        %1148 = vmatprep.subr.bf16.mxu0 0
        %1149 = vmatpush1.bf16.msra.mxu0 0
        %1150 = vmatprep.subr.bf16.mxu0 %v1066
        %1151 = vmatpush1.bf16.msra.mxu0 %v1065
        %1152 = vmatprep.subr.bf16.mxu0 0
        %1153 = vmatpush2.bf16.msra.mxu0 0
        %1154 = vmatprep.subr.bf16.mxu0 0
        %1155 = vmatpush2.bf16.msra.mxu0 0
        %1156 = vmatprep.subr.bf16.mxu0 0
        %1157 = vmatpush2.bf16.msra.mxu0 0
        %1158 = vmatprep.subr.bf16.mxu0 0
        %1159 = vmatpush2.bf16.msra.mxu0 0
        %1160 = vmatprep.subr.bf16.mxu0 0
        %1161 = vmatpush2.bf16.msra.mxu0 0
        %1162 = vmatprep.subr.bf16.mxu0 0
        %1163 = vmatpush2.bf16.msra.mxu0 0
        %1164 = vmatprep.subr.bf16.mxu0 0
        %1165 = vmatpush2.bf16.msra.mxu0 0
        %1166 = vmatprep.subr.bf16.mxu0 0
        %1167 = vmatpush2.bf16.msra.mxu0 0
        %1168 = vmatprep.mubr.bf16.mxu0 0
        %1169 = vmatmul.mubr.bf16.gmra.mxu0 %v1134
        %v1170 = vpop.f32.mrf.mxu0
        %v1171 = vadd.f32 %v1120, %v1170
        %v1172 = vpop.f32.mrf.mxu0
        %v1173 = vadd.f32 %v1122, %v1172
        %v1174 = vpop.f32.mrf.mxu0
        %v1175 = vadd.f32 %v1124, %v1174
        %v1176 = vpop.f32.mrf.mxu0
        %v1177 = vadd.f32 %v1126, %v1176
        %1178 = vdwg.mxu0
        %v1179 = vld [vmem:[%s7] sm:$0x3]
        %v1180 = vadd.f32 %v357, %v1171
        %v1181 = vadd.f32 %v358, %v1175
        %v1182 = vsel %vm421, %v1180, 0.0
        %1183 = vadd.xlane.f32.xlu0 %v1182
        %v1184 = vpop.xlane.xlu0 %1183
        %v1185 = vsel %vm421, %v1181, 0.0
        %1186 = vadd.xlane.f32.xlu0 %v1185
        %v1187 = vpop.xlane.xlu0 %1186
        %v1188 = vrcp.pop 32.0
        %v1189 = vmul.f32 %v1184, %v1188
        %v1190 = vmul.f32 %v1187, %v1188
        %v1191 = vsub.f32 %v1180, %v1189
        %v1192 = vsub.f32 %v1181, %v1190
        %v1193 = vmul.f32 %v1191, %v1191
        %v1194 = vmul.f32 %v1192, %v1192
        %v1195 = vsel %vm421, %v1193, 0.0
        %1196 = vadd.xlane.f32.xlu0 %v1195
        %v1197 = vpop.xlane.xlu0 %1196
        %v1198 = vsel %vm421, %v1194, 0.0
        %1199 = vadd.xlane.f32.xlu0 %v1198
        %v1200 = vpop.xlane.xlu0 %1199
        %v1201 = vmul.f32 %v1197, %v1188
        %v1202 = vmul.f32 %v1200, %v1188
        %v1203 = vadd.f32 %v1201, 1e-05
        %v1204 = vadd.f32 %v1202, 1e-05
        %v1205 = vrsqrt.pop %v1203
        %v1206 = vrsqrt.pop %v1204
        %v1207 = vmul.f32 %v1191, %v1205
        %v1208 = vmul.f32 %v1192, %v1206
        %v1209 = vlaneseq
        %v1210 = vshrl.u32 %v1209, 7
        %v1211 = vsub.s32 0, %v1210
        %v1212 = vrot.slane %v1179, %v1211
        %v1213 = vmul.f32 %v1207, %v1212
        %v1214 = vmul.f32 %v1208, %v1212
        %v1215 = vlaneseq
        %v1216 = vshrl.u32 %v1215, 7
        %v1217 = vsub.s32 1, %v1216
        %v1218 = vrot.slane %v1179, %v1217
        %v1219 = vadd.f32 %v1213, %v1218
        %v1220 = vadd.f32 %v1214, %v1218
        %1221 = vst.msk [vmem:[%s353] sm:$0xff] %vm421, %v1219
        %1222 = vst.msk [vmem:[%s353 + $0x8] sm:$0xff] %vm421, %v1220
        %1225 = vrot.lane.b32.xlu0 %v1171, 96
        %v1226 = vpop.permute.xlu0 %1225
        %1227 = vrot.lane.b32.xlu0 %v1175, 96
        %v1228 = vpop.permute.xlu0 %1227
        %v1231 = vadd.f32 %v359, %v1226
        %v1232 = vadd.f32 %v360, %v1228
        %v1233 = vsel %vm421, %v1231, 0.0
        %1234 = vadd.xlane.f32.xlu0 %v1233
        %v1235 = vpop.xlane.xlu0 %1234
        %v1236 = vsel %vm421, %v1232, 0.0
        %1237 = vadd.xlane.f32.xlu0 %v1236
        %v1238 = vpop.xlane.xlu0 %1237
        %v1239 = vmul.f32 %v1235, %v1188
        %v1240 = vmul.f32 %v1238, %v1188
        %v1241 = vsub.f32 %v1231, %v1239
        %v1242 = vsub.f32 %v1232, %v1240
        %v1243 = vmul.f32 %v1241, %v1241
        %v1244 = vmul.f32 %v1242, %v1242
        %v1245 = vsel %vm421, %v1243, 0.0
        %1246 = vadd.xlane.f32.xlu0 %v1245
        %v1247 = vpop.xlane.xlu0 %1246
        %v1248 = vsel %vm421, %v1244, 0.0
        %1249 = vadd.xlane.f32.xlu0 %v1248
        %v1250 = vpop.xlane.xlu0 %1249
        %v1251 = vmul.f32 %v1247, %v1188
        %v1252 = vmul.f32 %v1250, %v1188
        %v1253 = vadd.f32 %v1251, 1e-05
        %v1254 = vadd.f32 %v1252, 1e-05
        %v1255 = vrsqrt.pop %v1253
        %v1256 = vrsqrt.pop %v1254
        %v1257 = vmul.f32 %v1241, %v1255
        %v1258 = vmul.f32 %v1242, %v1256
        %v1259 = vmul.f32 %v1257, %v1212
        %v1260 = vmul.f32 %v1258, %v1212
        %v1261 = vadd.f32 %v1259, %v1218
        %v1262 = vadd.f32 %v1260, %v1218
        %s1263 = scalar_lea.vmem %s353, 16 [#allocation8]
        %1264 = vst.msk [vmem:[%s1263] sm:$0xff] %vm421, %v1261
        %1265 = vst.msk [vmem:[%s1263 + $0x8] sm:$0xff] %vm421, %v1262
        %1266 = vrot.lane.b32.xlu0 %v1171, 64
        %v1267 = vpop.permute.xlu0 %1266
        %1268 = vrot.lane.b32.xlu0 %v1175, 64
        %v1269 = vpop.permute.xlu0 %1268
        %v1272 = vadd.f32 %v361, %v1267
        %v1273 = vadd.f32 %v362, %v1269
        %v1274 = vsel %vm421, %v1272, 0.0
        %1275 = vadd.xlane.f32.xlu0 %v1274
        %v1276 = vpop.xlane.xlu0 %1275
        %v1277 = vsel %vm421, %v1273, 0.0
        %1278 = vadd.xlane.f32.xlu0 %v1277
        %v1279 = vpop.xlane.xlu0 %1278
        %v1280 = vmul.f32 %v1276, %v1188
        %v1281 = vmul.f32 %v1279, %v1188
        %v1282 = vsub.f32 %v1272, %v1280
        %v1283 = vsub.f32 %v1273, %v1281
        %v1284 = vmul.f32 %v1282, %v1282
        %v1285 = vmul.f32 %v1283, %v1283
        %v1286 = vsel %vm421, %v1284, 0.0
        %1287 = vadd.xlane.f32.xlu0 %v1286
        %v1288 = vpop.xlane.xlu0 %1287
        %v1289 = vsel %vm421, %v1285, 0.0
        %1290 = vadd.xlane.f32.xlu0 %v1289
        %v1291 = vpop.xlane.xlu0 %1290
        %v1292 = vmul.f32 %v1288, %v1188
        %v1293 = vmul.f32 %v1291, %v1188
        %v1294 = vadd.f32 %v1292, 1e-05
        %v1295 = vadd.f32 %v1293, 1e-05
        %v1296 = vrsqrt.pop %v1294
        %v1297 = vrsqrt.pop %v1295
        %v1298 = vmul.f32 %v1282, %v1296
        %v1299 = vmul.f32 %v1283, %v1297
        %v1300 = vmul.f32 %v1298, %v1212
        %v1301 = vmul.f32 %v1299, %v1212
        %v1302 = vadd.f32 %v1300, %v1218
        %v1303 = vadd.f32 %v1301, %v1218
        %s1304 = scalar_lea.vmem %s353, 32 [#allocation8]
        %1305 = vst.msk [vmem:[%s1304] sm:$0xff] %vm421, %v1302
        %1306 = vst.msk [vmem:[%s1304 + $0x8] sm:$0xff] %vm421, %v1303
        %1307 = vrot.lane.b32.xlu0 %v1171, 32
        %v1308 = vpop.permute.xlu0 %1307
        %1309 = vrot.lane.b32.xlu0 %v1175, 32
        %v1310 = vpop.permute.xlu0 %1309
        %v1313 = vadd.f32 %v363, %v1308
        %v1314 = vadd.f32 %v364, %v1310
        %v1315 = vsel %vm421, %v1313, 0.0
        %1316 = vadd.xlane.f32.xlu0 %v1315
        %v1317 = vpop.xlane.xlu0 %1316
        %v1318 = vsel %vm421, %v1314, 0.0
        %1319 = vadd.xlane.f32.xlu0 %v1318
        %v1320 = vpop.xlane.xlu0 %1319
        %v1321 = vmul.f32 %v1317, %v1188
        %v1322 = vmul.f32 %v1320, %v1188
        %v1323 = vsub.f32 %v1313, %v1321
        %v1324 = vsub.f32 %v1314, %v1322
        %v1325 = vmul.f32 %v1323, %v1323
        %v1326 = vmul.f32 %v1324, %v1324
        %v1327 = vsel %vm421, %v1325, 0.0
        %1328 = vadd.xlane.f32.xlu0 %v1327
        %v1329 = vpop.xlane.xlu0 %1328
        %v1330 = vsel %vm421, %v1326, 0.0
        %1331 = vadd.xlane.f32.xlu0 %v1330
        %v1332 = vpop.xlane.xlu0 %1331
        %v1333 = vmul.f32 %v1329, %v1188
        %v1334 = vmul.f32 %v1332, %v1188
        %v1335 = vadd.f32 %v1333, 1e-05
        %v1336 = vadd.f32 %v1334, 1e-05
        %v1337 = vrsqrt.pop %v1335
        %v1338 = vrsqrt.pop %v1336
        %v1339 = vmul.f32 %v1323, %v1337
        %v1340 = vmul.f32 %v1324, %v1338
        %v1341 = vmul.f32 %v1339, %v1212
        %v1342 = vmul.f32 %v1340, %v1212
        %v1343 = vadd.f32 %v1341, %v1218
        %v1344 = vadd.f32 %v1342, %v1218
        %s1345 = scalar_lea.vmem %s353, 48 [#allocation8]
        %1346 = vst.msk [vmem:[%s1345] sm:$0xff] %vm421, %v1343
        %1347 = vst.msk [vmem:[%s1345 + $0x8] sm:$0xff] %vm421, %v1344
        %v1348 = vadd.f32 %v365, %v1173
        %v1349 = vadd.f32 %v366, %v1177
        %v1350 = vsel %vm421, %v1348, 0.0
        %1351 = vadd.xlane.f32.xlu0 %v1350
        %v1352 = vpop.xlane.xlu0 %1351
        %v1353 = vsel %vm421, %v1349, 0.0
        %1354 = vadd.xlane.f32.xlu0 %v1353
        %v1355 = vpop.xlane.xlu0 %1354
        %v1356 = vmul.f32 %v1352, %v1188
        %v1357 = vmul.f32 %v1355, %v1188
        %v1358 = vsub.f32 %v1348, %v1356
        %v1359 = vsub.f32 %v1349, %v1357
        %v1360 = vmul.f32 %v1358, %v1358
        %v1361 = vmul.f32 %v1359, %v1359
        %v1362 = vsel %vm421, %v1360, 0.0
        %1363 = vadd.xlane.f32.xlu0 %v1362
        %v1364 = vpop.xlane.xlu0 %1363
        %v1365 = vsel %vm421, %v1361, 0.0
        %1366 = vadd.xlane.f32.xlu0 %v1365
        %v1367 = vpop.xlane.xlu0 %1366
        %v1368 = vmul.f32 %v1364, %v1188
        %v1369 = vmul.f32 %v1367, %v1188
        %v1370 = vadd.f32 %v1368, 1e-05
        %v1371 = vadd.f32 %v1369, 1e-05
        %v1372 = vrsqrt.pop %v1370
        %v1373 = vrsqrt.pop %v1371
        %v1374 = vmul.f32 %v1358, %v1372
        %v1375 = vmul.f32 %v1359, %v1373
        %v1376 = vmul.f32 %v1374, %v1212
        %v1377 = vmul.f32 %v1375, %v1212
        %v1378 = vadd.f32 %v1376, %v1218
        %v1379 = vadd.f32 %v1377, %v1218
        %s1380 = scalar_lea.vmem %s353, 64 [#allocation8]
        %1381 = vst.msk [vmem:[%s1380] sm:$0xff] %vm421, %v1378
        %1382 = vst.msk [vmem:[%s1380 + $0x8] sm:$0xff] %vm421, %v1379
        %1385 = vrot.lane.b32.xlu0 %v1173, 96
        %v1386 = vpop.permute.xlu0 %1385
        %1387 = vrot.lane.b32.xlu0 %v1177, 96
        %v1388 = vpop.permute.xlu0 %1387
        %v1391 = vadd.f32 %v367, %v1386
        %v1392 = vadd.f32 %v368, %v1388
        %v1393 = vsel %vm421, %v1391, 0.0
        %1394 = vadd.xlane.f32.xlu0 %v1393
        %v1395 = vpop.xlane.xlu0 %1394
        %v1396 = vsel %vm421, %v1392, 0.0
        %1397 = vadd.xlane.f32.xlu0 %v1396
        %v1398 = vpop.xlane.xlu0 %1397
        %v1399 = vmul.f32 %v1395, %v1188
        %v1400 = vmul.f32 %v1398, %v1188
        %v1401 = vsub.f32 %v1391, %v1399
        %v1402 = vsub.f32 %v1392, %v1400
        %v1403 = vmul.f32 %v1401, %v1401
        %v1404 = vmul.f32 %v1402, %v1402
        %v1405 = vsel %vm421, %v1403, 0.0
        %1406 = vadd.xlane.f32.xlu0 %v1405
        %v1407 = vpop.xlane.xlu0 %1406
        %v1408 = vsel %vm421, %v1404, 0.0
        %1409 = vadd.xlane.f32.xlu0 %v1408
        %v1410 = vpop.xlane.xlu0 %1409
        %v1411 = vmul.f32 %v1407, %v1188
        %v1412 = vmul.f32 %v1410, %v1188
        %v1413 = vadd.f32 %v1411, 1e-05
        %v1414 = vadd.f32 %v1412, 1e-05
        %v1415 = vrsqrt.pop %v1413
        %v1416 = vrsqrt.pop %v1414
        %v1417 = vmul.f32 %v1401, %v1415
        %v1418 = vmul.f32 %v1402, %v1416
        %v1419 = vmul.f32 %v1417, %v1212
        %v1420 = vmul.f32 %v1418, %v1212
        %v1421 = vadd.f32 %v1419, %v1218
        %v1422 = vadd.f32 %v1420, %v1218
        %s1423 = scalar_lea.vmem %s353, 80 [#allocation8]
        %1424 = vst.msk [vmem:[%s1423] sm:$0xff] %vm421, %v1421
        %1425 = vst.msk [vmem:[%s1423 + $0x8] sm:$0xff] %vm421, %v1422
        %1426 = vrot.lane.b32.xlu0 %v1173, 64
        %v1427 = vpop.permute.xlu0 %1426
        %1428 = vrot.lane.b32.xlu0 %v1177, 64
        %v1429 = vpop.permute.xlu0 %1428
        %v1432 = vadd.f32 %v369, %v1427
        %v1433 = vadd.f32 %v370, %v1429
        %v1434 = vsel %vm421, %v1432, 0.0
        %1435 = vadd.xlane.f32.xlu0 %v1434
        %v1436 = vpop.xlane.xlu0 %1435
        %v1437 = vsel %vm421, %v1433, 0.0
        %1438 = vadd.xlane.f32.xlu0 %v1437
        %v1439 = vpop.xlane.xlu0 %1438
        %v1440 = vmul.f32 %v1436, %v1188
        %v1441 = vmul.f32 %v1439, %v1188
        %v1442 = vsub.f32 %v1432, %v1440
        %v1443 = vsub.f32 %v1433, %v1441
        %v1444 = vmul.f32 %v1442, %v1442
        %v1445 = vmul.f32 %v1443, %v1443
        %v1446 = vsel %vm421, %v1444, 0.0
        %1447 = vadd.xlane.f32.xlu0 %v1446
        %v1448 = vpop.xlane.xlu0 %1447
        %v1449 = vsel %vm421, %v1445, 0.0
        %1450 = vadd.xlane.f32.xlu0 %v1449
        %v1451 = vpop.xlane.xlu0 %1450
        %v1452 = vmul.f32 %v1448, %v1188
        %v1453 = vmul.f32 %v1451, %v1188
        %v1454 = vadd.f32 %v1452, 1e-05
        %v1455 = vadd.f32 %v1453, 1e-05
        %v1456 = vrsqrt.pop %v1454
        %v1457 = vrsqrt.pop %v1455
        %v1458 = vmul.f32 %v1442, %v1456
        %v1459 = vmul.f32 %v1443, %v1457
        %v1460 = vmul.f32 %v1458, %v1212
        %v1461 = vmul.f32 %v1459, %v1212
        %v1462 = vadd.f32 %v1460, %v1218
        %v1463 = vadd.f32 %v1461, %v1218
        %s1464 = scalar_lea.vmem %s353, 96 [#allocation8]
        %1465 = vst.msk [vmem:[%s1464] sm:$0xff] %vm421, %v1462
        %1466 = vst.msk [vmem:[%s1464 + $0x8] sm:$0xff] %vm421, %v1463
        %1467 = vrot.lane.b32.xlu0 %v1173, 32
        %v1468 = vpop.permute.xlu0 %1467
        %1469 = vrot.lane.b32.xlu0 %v1177, 32
        %v1470 = vpop.permute.xlu0 %1469
        %v1473 = vadd.f32 %v371, %v1468
        %v1474 = vadd.f32 %v372, %v1470
        %v1475 = vsel %vm421, %v1473, 0.0
        %1476 = vadd.xlane.f32.xlu0 %v1475
        %v1477 = vpop.xlane.xlu0 %1476
        %v1478 = vsel %vm421, %v1474, 0.0
        %1479 = vadd.xlane.f32.xlu0 %v1478
        %v1480 = vpop.xlane.xlu0 %1479
        %v1481 = vmul.f32 %v1477, %v1188
        %v1482 = vmul.f32 %v1480, %v1188
        %v1483 = vsub.f32 %v1473, %v1481
        %v1484 = vsub.f32 %v1474, %v1482
        %v1485 = vmul.f32 %v1483, %v1483
        %v1486 = vmul.f32 %v1484, %v1484
        %v1487 = vsel %vm421, %v1485, 0.0
        %1488 = vadd.xlane.f32.xlu0 %v1487
        %v1489 = vpop.xlane.xlu0 %1488
        %v1490 = vsel %vm421, %v1486, 0.0
        %1491 = vadd.xlane.f32.xlu0 %v1490
        %v1492 = vpop.xlane.xlu0 %1491
        %v1493 = vmul.f32 %v1489, %v1188
        %v1494 = vmul.f32 %v1492, %v1188
        %v1495 = vadd.f32 %v1493, 1e-05
        %v1496 = vadd.f32 %v1494, 1e-05
        %v1497 = vrsqrt.pop %v1495
        %v1498 = vrsqrt.pop %v1496
        %v1499 = vmul.f32 %v1483, %v1497
        %v1500 = vmul.f32 %v1484, %v1498
        %v1501 = vmul.f32 %v1499, %v1212
        %v1502 = vmul.f32 %v1500, %v1212
        %v1503 = vadd.f32 %v1501, %v1218
        %v1504 = vadd.f32 %v1502, %v1218
        %s1505 = scalar_lea.vmem %s353, 112 [#allocation8]
        %1506 = vst.msk [vmem:[%s1505] sm:$0xff] %vm421, %v1503
        %1507 = vst.msk [vmem:[%s1505 + $0x8] sm:$0xff] %vm421, %v1504
        %s1508 = sand.u32 %s207, 1
        %s1509 = scalar_lea.sflag [#allocation4], %s1508
        %s1510 = sand.u32 %s207, 1
        %s1511 = smul.addr %s1510, 128
        %s1512 = scalar_lea.vmem [#allocation8], %s1511
        // Predicated region
        $region65: #{tpu_custom_call.1} parent=51 // pred_check
          %p1513 = pneg %p217
        $region66: #{tpu_custom_call.1} parent=51 // pred_check_branch
          %1515 = sbr.rel (%p1513) target = $region68
        $region67: #{tpu_custom_call.1} parent=51 // pred_region
          %s1516 = smul.u32 8, %s26
          %s1518 = ssub.s32 2048, 2048
          %1519 = vsyncadd %s1509, %s1518
          %s1520 = smul.addr %s1516, 2
          %s1521 = smul.addr %s1520, 128
          %s1522 = scalar_lea.hbm %s8, %s1521
          %s1523 = sshll.u32 %s1512, 4
          %s1524 = int_to_ptr.vmem [resolvable:$true] %s1523
          %1529 = dma.vmem_to_hbm [thread:$0]  %s1524, 2048, %s1522, %s1509, 128, 128, 8
        $region68: #{tpu_custom_call.1} parent=51 // pred_fallthru
          _
      $region52: #{tpu_custom_call.1} parent=5 // pred_fallthru
        _
      %p1530 = scmp.le.s32.totalorder 2, %s21
      // Predicated region
      $region69: #{tpu_custom_call.1} parent=5 // pred_check
        %p1531 = pneg %p1530
      $region70: #{tpu_custom_call.1} parent=5 // pred_check_branch
        %1533 = sbr.rel (%p1531) target = $region72
      $region71: #{tpu_custom_call.1} parent=5 // pred_region
        %s1534 = ssub.s32 %s21, 2
        // Predicated region
        $region73: #{tpu_custom_call.1} parent=71 // pred_check
          %p1535 = pneg %p223
        $region74: #{tpu_custom_call.1} parent=71 // pred_check_branch
          %1537 = sbr.rel (%p1535) target = $region76
        $region75: #{tpu_custom_call.1} parent=71 // pred_region
          %s1538 = sand.u32 %s208, 1
          %s1539 = scalar_lea.sflag [#allocation4], %s1538
          %s1540 = sand.u32 %s208, 1
          %s1541 = smul.addr %s1540, 128
          %s1542 = scalar_lea.vmem [#allocation8], %s1541
          %1543 = dma.done %s1539, 2048
        $region76: #{tpu_custom_call.1} parent=71 // pred_fallthru
          _
      $region72: #{tpu_custom_call.1} parent=5 // pred_fallthru
        _
    $region6: #{tpu_custom_call.1} parent=1 // loop_footer
      %s25 = sadd.s32 1, %s21
    $region7: #{tpu_custom_call.1} parent=1 // loop_footer_branch
      %20 = sbr.rel target = $region3
    $region8: #{tpu_custom_call.1} parent=1 // loop_exit
      _
    %1544 = vsyncpa [#allocation3], 1
    %s1545 = scalar_lea.sflag [#allocation3], 1
    %1546 = vsyncpa %s1545, 1
    %1547 = vsyncpa [#allocation6], 1
    %1548 = vsyncpa [#allocation4], 1
    %s1549 = scalar_lea.sflag [#allocation4], 1
    %1550 = vsyncpa %s1549, 1

</llo_original>
